<compile_context>
chip_gen: v6e
topology: v6e:2x2x1
jax: 0.10.0
libtpu: 0.0.40
codegen_flags: <defaults>
</compile_context>

<pallas_src>
import math
import functools

import jax
import jax.numpy as jnp
from jax import lax
from jax.experimental import pallas as pl
from jax.experimental.pallas import tpu as pltpu


# ----------------------------- small helpers ------------------------------

def _round_up(a, b):
    return pl.cdiv(a, b) * b


def _pad_axis(a, axis, target):
    pad = target - a.shape[axis]
    if pad == 0:
        return a
    widths = [(0, 0)] * a.ndim
    widths[axis] = (0, pad)
    return jnp.pad(a, widths)


def _vmem_limit_bytes():
    # ~62.5% of physical VMEM: ~40 MiB on v7x (64 MiB), 80 MiB on v5e/v6e (128 MiB).
    phys = 64 * 1024 * 1024
    try:
        info = pltpu.get_tpu_info()
        phys = int(getattr(info, "vmem_capacity_bytes", phys)) or phys
    except Exception:
        pass
    return min((phys * 5) // 8, 80 * 1024 * 1024)


def _const_spec(shape, pipeline_mode):
    """BlockSpec for a block whose index never changes (weights/biases)."""
    idx = lambda b, t: (0,) * len(shape)
    if pipeline_mode is None:
        return pl.BlockSpec(shape, idx)
    # Single-buffer the constant weight blocks (halves weight residency on v7x).
    return pl.BlockSpec(shape, idx, pipeline_mode=pipeline_mode)


def _layer_norm(x, alpha, bias, eps=1e-6):
    # Matches PyTorch LayerNormalization: torch.std is unbiased (ddof=1),
    # formula alpha*(x-mean)/(std+eps)+bias with scalar alpha/bias.
    d = x.shape[-1]
    mean = jnp.mean(x, axis=-1, keepdims=True)
    var = jnp.sum((x - mean) ** 2, axis=-1, keepdims=True) * (1.0 / (d - 1))
    inv = pl.reciprocal(jnp.sqrt(var) + eps, approx=True)   # EUP slot
    return alpha * (x - mean) * inv + bias


# ------------------- kernel 1: hoisted K/V projection ----------------------

def _kv_project_kernel(x_ref, wkv_ref, ln_ref, k_ref, v_ref, *, h, apply_ln):
    """Project one sequence tile to head-major K/V (bf16).

    x_ref  : (ts, D)  f32 source rows (target x, or encoder output)
    wkv_ref: (D, 2D)  bf16 fused [K | V] projection weight
    ln_ref : (2,)     f32 SMEM [alpha, bias] of the pre-norm (self-attn only)
    k_ref  : (h, ts, d_k) bf16 out
    v_ref  : (h, ts, d_k) bf16 out
    """
    x = x_ref[...]
    if apply_ln:
        x = _layer_norm(x, ln_ref[0], ln_ref[1])
    d = x.shape[-1]
    d_k = d // h
    # One wide (ts, D) x (D, 2D) MXU matmul.
    kv = jnp.dot(x.astype(jnp.bfloat16), wkv_ref[...],
                 preferred_element_type=jnp.float32).astype(jnp.bfloat16)
    # Head-major scatter: the d_k-lane slicing happens ONCE per sequence tile
    # here, instead of 2*h times per q-tile inside the decoder kernel.
    for i in range(h):
        k_ref[i] = kv[:, i * d_k:(i + 1) * d_k]
        v_ref[i] = kv[:, d + i * d_k:d + (i + 1) * d_k]


def _kv_project(src, wkv_bf16, ln01, *, h, seq_tile, vmem_limit, weight_mode):
    """Returns head-major K, V of shape (B, h, S, d_k), bf16."""
    B, S, D = src.shape
    d_k = D // h
    ts = min(seq_tile, _round_up(S, 8))
    Sp = _round_up(S, ts)
    srcp = _pad_axis(src, 1, Sp)

    apply_ln = ln01 is not None
    ln_arr = ln01 if apply_ln else jnp.zeros((2,), jnp.float32)

    k, v = pl.pallas_call(
        functools.partial(_kv_project_kernel, h=h, apply_ln=apply_ln),
        out_shape=(jax.ShapeDtypeStruct((B, h, Sp, d_k), jnp.bfloat16),
                   jax.ShapeDtypeStruct((B, h, Sp, d_k), jnp.bfloat16)),
        grid=(B, Sp // ts),
        in_specs=[
            pl.BlockSpec((None, ts, D), lambda b, s: (b, s, 0)),
            _const_spec((D, 2 * D), weight_mode),
            pl.BlockSpec(memory_space=pltpu.MemorySpace.SMEM),
        ],
        out_specs=(
            pl.BlockSpec((None, h, ts, d_k), lambda b, s: (b, 0, s, 0)),
            pl.BlockSpec((None, h, ts, d_k), lambda b, s: (b, 0, s, 0)),
        ),
        compiler_params=pltpu.CompilerParams(
            dimension_semantics=("parallel", "parallel"),
            vmem_limit_bytes=vmem_limit),
    )(srcp, wkv_bf16, ln_arr)
    return k[:, :, :S, :], v[:, :, :S, :]


# ------------------- kernel 2: fused decoder block --------------------------

def _mha(xn, k_ref, v_ref, add_bias, wq, wo, h):
    """xn: (tq, D) f32 queries-source; k_ref/v_ref: (h, Sk, d_k) bf16 head-major
    refs; add_bias: (tq, Sk) additive mask (0 / -1e9); wq (scale folded) / wo:
    (D, D) bf16."""
    tq, d_model = xn.shape
    d_k = d_model // h

    # Single wide Q projection (1/sqrt(d_k) already folded into wq).
    q = jnp.dot(xn.astype(jnp.bfloat16), wq,
                preferred_element_type=jnp.float32).astype(jnp.bfloat16)

    # Static unroll over heads (h is small here; switch to lax.fori_loop for
    # large h in real configs).  K/V per head come from leading-dim indexing of
    # the head-major refs -- no 32-lane slicing in the inner loop.
    ctx = []
    for i in range(h):
        qi = q[:, i * d_k:(i + 1) * d_k]
        ki = k_ref[i]
        vi = v_ref[i]
        s = lax.dot_general(qi, ki, (((1,), (1,)), ((), ())),
                            preferred_element_type=jnp.float32)   # (tq, Sk)
        s = s + add_bias
        m = jnp.max(s, axis=-1, keepdims=True)
        p = jnp.exp(s - m)
        denom = jnp.sum(p, axis=-1, keepdims=True)
        attn = (p * pl.reciprocal(denom, approx=True)).astype(jnp.bfloat16)
        ctx.append(jnp.dot(attn, vi,
                           preferred_element_type=jnp.float32).astype(jnp.bfloat16))

    # One lane-dense (tq, D) context, then ONE full-depth (D x D) Wo matmul.
    ctx = jnp.concatenate(ctx, axis=-1)
    return jnp.dot(ctx, wo, preferred_element_type=jnp.float32)


def _decoder_block_kernel(x_ref, ks_ref, vs_ref, kc_ref, vc_ref,
                          tgtb_ref, srcb_ref,
                          sa_wq_ref, sa_wo_ref, ca_wq_ref, ca_wo_ref,
                          w1_ref, b1_ref, w2_ref, b2_ref,
                          ln_a_ref, ln_b_ref, out_ref, *, h):
    x = x_ref[...]                       # (tq, D) f32
    tgt_bias = tgtb_ref[...]             # (tq, S_q) bf16 additive mask
    src_bias = srcb_ref[...]             # (tq, S_k) bf16 additive mask

    # TODO(synk): nn.Dropout layers are identity here (inference / p = 0).

    # residual 0: self-attention (pre-norm).  K/V were precomputed from LN(x)
    # of the full target sequence by the _kv_project kernel.
    xn = _layer_norm(x, ln_a_ref[0], ln_b_ref[0])
    x = x + _mha(xn, ks_ref, vs_ref, tgt_bias, sa_wq_ref[...], sa_wo_ref[...], h)

    # residual 1: cross-attention (K/V precomputed from raw encoder output).
    xn = _layer_norm(x, ln_a_ref[1], ln_b_ref[1])
    x = x + _mha(xn, kc_ref, vc_ref, src_bias, ca_wq_ref[...], ca_wo_ref[...], h)

    # residual 2: feed-forward (Linear -> ReLU -> Linear), bf16 MXU, f32 accum.
    xn = _layer_norm(x, ln_a_ref[2], ln_b_ref[2])
    hdn = jnp.dot(xn.astype(jnp.bfloat16), w1_ref[...],
                  preferred_element_type=jnp.float32) + b1_ref[...]
    hdn = jnp.maximum(hdn, 0.0)
    x = x + jnp.dot(hdn.astype(jnp.bfloat16), w2_ref[...],
                    preferred_element_type=jnp.float32) + b2_ref[...]

    out_ref[...] = x


# -------------------------------- wrapper ----------------------------------

def decoder_block(x, enc, src_mask, tgt_mask, params, *,
                  h, q_tile=128, kv_seq_tile=256):
    B, S_q, D = x.shape
    S_k = enc.shape[1]
    assert D % h == 0, "d_model not divisible by h"
    assert q_tile % 16 == 0, "q_tile must be a multiple of 16"
    d_k = D // h
    d_ff = params["w1"].shape[1]

    f32, bf16 = jnp.float32, jnp.bfloat16
    scale = 1.0 / math.sqrt(d_k)

    # bf16 weights (MXU-native; halves weight DMA).  1/sqrt(d_k) folded into Wq.
    sa_wq = (params["sa_wq"] * scale).astype(bf16)
    sa_wo = params["sa_wo"].astype(bf16)
    sa_wkv = jnp.concatenate([params["sa_wk"], params["sa_wv"]], axis=1).astype(bf16)
    ca_wq = (params["ca_wq"] * scale).astype(bf16)
    ca_wo = params["ca_wo"].astype(bf16)
    ca_wkv = jnp.concatenate([params["ca_wk"], params["ca_wv"]], axis=1).astype(bf16)
    w1 = params["w1"].astype(bf16)
    w2 = params["w2"].astype(bf16)
    b1 = params["b1"].reshape(1, d_ff).astype(f32)
    b2 = params["b2"].reshape(1, D).astype(f32)
    ln_a = params["ln_alpha"].astype(f32)
    ln_b = params["ln_bias"].astype(f32)
    ln0 = jnp.stack([ln_a[0], ln_b[0]])

    # Additive attention bias (0 keep / -1e9 mask) as bf16, computed ONCE here
    # and reused by every head / q-tile.  (Additive vs. masked_fill(-1e9) is
    # numerically indistinguishable after softmax.)
    tgt_bias = jnp.where(tgt_mask != 0, 0.0, -1e9).astype(bf16)   # (B, S_q, S_q)
    src_bias = jnp.where(src_mask != 0, 0.0, -1e9).astype(bf16)   # (B, S_q, S_k)

    # Query-axis padding only (key axes are always full blocks => no mask fixup;
    # padded query rows are computed but cropped from the output).
    tq = min(q_tile, _round_up(S_q, 16))
    S_qp = _round_up(S_q, tq)
    n_qt = S_qp // tq
    xp = _pad_axis(x, 1, S_qp)
    tgt_bias = _pad_axis(tgt_bias, 1, S_qp)
    src_bias = _pad_axis(src_bias, 1, S_qp)

    vmem = _vmem_limit_bytes()

    def run(weight_mode):
        # Hoisted K/V projections (once per sequence, not once per q-tile).
        k_self, v_self = _kv_project(x, sa_wkv, ln0, h=h, seq_tile=kv_seq_tile,
                                     vmem_limit=vmem, weight_mode=weight_mode)
        k_cross, v_cross = _kv_project(enc, ca_wkv, None, h=h, seq_tile=kv_seq_tile,
                                       vmem_limit=vmem, weight_mode=weight_mode)

        per_qtile = lambda last: pl.BlockSpec((None, tq, last),
                                              lambda b, qt: (b, qt, 0))
        per_batch_kv = lambda s: pl.BlockSpec((None, h, s, d_k),
                                              lambda b, qt: (b, 0, 0, 0))
        smem = lambda: pl.BlockSpec(memory_space=pltpu.MemorySpace.SMEM)

        in_specs = [
            per_qtile(D),                                  # x q-tile
            per_batch_kv(S_q), per_batch_kv(S_q),          # self-attn K, V
            per_batch_kv(S_k), per_batch_kv(S_k),          # cross-attn K, V
            per_qtile(S_q),                                # tgt additive bias
            per_qtile(S_k),                                # src additive bias
            _const_spec((D, D), weight_mode),              # sa Wq (scaled)
            _const_spec((D, D), weight_mode),              # sa Wo
            _const_spec((D, D), weight_mode),              # ca Wq (scaled)
            _const_spec((D, D), weight_mode),              # ca Wo
            _const_spec((D, d_ff), weight_mode),           # FFN W1
            _const_spec((1, d_ff), weight_mode),           # FFN b1
            _const_spec((d_ff, D), weight_mode),           # FFN W2
            _const_spec((1, D), weight_mode),              # FFN b2
            smem(), smem(),                                # LN alpha / bias (3,)
        ]
        out_spec = pl.BlockSpec((None, tq, D), lambda b, qt: (b, qt, 0))

        out = pl.pallas_call(
            functools.partial(_decoder_block_kernel, h=h),
            out_shape=jax.ShapeDtypeStruct((B, S_qp, D), f32),
            grid=(B, n_qt),
            in_specs=in_specs,
            out_specs=out_spec,
            compiler_params=pltpu.CompilerParams(
                dimension_semantics=("parallel", "parallel"),
                vmem_limit_bytes=vmem),
        )(xp, k_self, v_self, k_cross, v_cross, tgt_bias, src_bias,
          sa_wq, sa_wo, ca_wq, ca_wo, w1, b1, w2, b2, ln_a, ln_b)
        return out[:, :S_q, :]

    # Prefer single-buffered constant weight blocks (v7x VMEM discipline); fall
    # back to default double-buffering if pipeline_mode isn't supported.
    if hasattr(pl, "Buffered"):
        try:
            return run(pl.Buffered(1))
        except Exception:
            pass
    return run(None)


# ------------------------- plain-JAX reference ------------------------------

def decoder_block_ref(x, enc, src_mask, tgt_mask, p, *, h):
    def ln(x, a, b, eps=1e-6):
        d = x.shape[-1]
        mean = x.mean(-1, keepdims=True)
        std = jnp.sqrt(((x - mean) ** 2).sum(-1, keepdims=True) / (d - 1))
        return a * (x - mean) / (std + eps) + b

    def mha(qi, kvi, mask, wq, wk, wv, wo):
        B, Sq, D = qi.shape
        Sk = kvi.shape[1]
        d_k = D // h
        q = (qi @ wq).reshape(B, Sq, h, d_k).transpose(0, 2, 1, 3)
        k = (kvi @ wk).reshape(B, Sk, h, d_k).transpose(0, 2, 1, 3)
        v = (kvi @ wv).reshape(B, Sk, h, d_k).transpose(0, 2, 1, 3)
        scores = q @ k.transpose(0, 1, 3, 2) / math.sqrt(d_k)
        scores = jnp.where(mask[:, None, :, :] == 0, -1e9, scores)
        attn = jax.nn.softmax(scores, -1)
        o = (attn @ v).transpose(0, 2, 1, 3).reshape(B, Sq, D)
        return o @ wo

    x = x + mha(ln(x, p["ln_alpha"][0], p["ln_bias"][0]),
                ln(x, p["ln_alpha"][0], p["ln_bias"][0]),
                tgt_mask, p["sa_wq"], p["sa_wk"], p["sa_wv"], p["sa_wo"])
    x = x + mha(ln(x, p["ln_alpha"][1], p["ln_bias"][1]), enc,
                src_mask, p["ca_wq"], p["ca_wk"], p["ca_wv"], p["ca_wo"])
    xn = ln(x, p["ln_alpha"][2], p["ln_bias"][2])
    x = x + (jnp.maximum(xn @ p["w1"] + p["b1"], 0.0) @ p["w2"] + p["b2"])
    return x


# ----------------------------------- main -----------------------------------

if __name__ == "__main__":
    # Lane-dense small config: D multiple of 128; q_tile=32 exercises the
    # (batch, q_tile) parallel grid = (2, 2) plus the hoisted K/V projection.
    B, S_Q, S_K, D, H, D_FF = 2, 64, 64, 128, 4, 256

    key = jax.random.PRNGKey(0)
    ks = jax.random.split(key, 16)

    def w(k, shape, scale=0.08):
        return (scale * jax.random.normal(k, shape)).astype(jnp.float32)

    params = {
        "sa_wq": w(ks[0], (D, D)), "sa_wk": w(ks[1], (D, D)),
        "sa_wv": w(ks[2], (D, D)), "sa_wo": w(ks[3], (D, D)),
        "ca_wq": w(ks[4], (D, D)), "ca_wk": w(ks[5], (D, D)),
        "ca_wv": w(ks[6], (D, D)), "ca_wo": w(ks[7], (D, D)),
        "w1": w(ks[8], (D, D_FF)), "b1": w(ks[9], (1, D_FF)),
        "w2": w(ks[10], (D_FF, D)), "b2": w(ks[11], (1, D)),
        # LayerNormalization init: alpha = ones(1), bias = ones(1)  (3 residual blocks)
        "ln_alpha": jnp.ones((3,), jnp.float32),
        "ln_bias": jnp.ones((3,), jnp.float32),
    }

    x = jax.random.normal(ks[12], (B, S_Q, D), dtype=jnp.float32)
    enc = jax.random.normal(ks[13], (B, S_K, D), dtype=jnp.float32)

    # causal target mask, all-ones source mask (1=keep, 0=mask)
    tgt_mask = jnp.tril(jnp.ones((S_Q, S_Q), jnp.float32))[None].repeat(B, axis=0)
    src_mask = jnp.ones((B, S_Q, S_K), jnp.float32)

    out = decoder_block(x, enc, src_mask, tgt_mask, params, h=H, q_tile=32)
    out = jax.block_until_ready(out)

    ref = decoder_block_ref(x, enc, src_mask, tgt_mask, params, h=H)
    assert out.shape == (B, S_Q, D)
    max_err = float(jnp.max(jnp.abs(out - ref)))
    # bf16 MXU matmuls (weights + activations) through ~7 matmul layers plus
    # approx reciprocals => relaxed tolerance vs. the f32 reference.
    assert jnp.allclose(out, ref, atol=6e-2, rtol=3e-2), \
        f"mismatch vs JAX reference (max abs err {max_err})"

    print("KERNEL_OK")
</pallas_src>

<mosaic_0001>
module attributes {stable_mosaic.version = 11 : i64} {
  func.func @_kv_project_kernel(%arg0: i32, %arg1: i32, %arg2: memref<1x64x128xf32, #tpu.memory_space<vmem>>, %arg3: memref<128x256xbf16, #tpu.memory_space<vmem>>, %arg4: memref<2xf32, #tpu.memory_space<smem>>, %arg5: memref<1x4x64x32xbf16, #tpu.memory_space<vmem>>, %arg6: memref<1x4x64x32xbf16, #tpu.memory_space<vmem>>) attributes {dimension_semantics = [#tpu.dimension_semantics<parallel>, #tpu.dimension_semantics<parallel>], iteration_bounds = array<i64: 2, 1>, scalar_prefetch = 0 : i64, scratch_operands = 0 : i64, tpu.core_type = #tpu.core_type<tc>, window_params = [{transform_indices = @transform_0, window_bounds = array<i64: 1, 64, 128>}, {pipeline_mode = #tpu.pipeline_mode<synchronous>, transform_indices = @transform_1, window_bounds = array<i64: 128, 256>}, {transform_indices = @transform_2, window_bounds = array<i64: 2>}, {transform_indices = @transform_3, window_bounds = array<i64: 1, 4, 64, 32>}, {transform_indices = @transform_4, window_bounds = array<i64: 1, 4, 64, 32>}]} {
    %c0 = arith.constant 0 : index
    %c0_0 = arith.constant 0 : index
    %c0_1 = arith.constant 0 : index
    %0 = vector.load %arg2[%c0, %c0_0, %c0_1] : memref<1x64x128xf32, #tpu.memory_space<vmem>>, vector<1x64x128xf32>
    %1 = vector.shape_cast %0 : vector<1x64x128xf32> to vector<64x128xf32>
    %c0_2 = arith.constant 0 : index
    %2 = memref.load %arg4[%c0_2] : memref<2xf32, #tpu.memory_space<smem>>
    %c1 = arith.constant 1 : index
    %3 = memref.load %arg4[%c1] : memref<2xf32, #tpu.memory_space<smem>>
    %cst = arith.constant dense<0.000000e+00> : vector<64xf32>
    %4 = vector.multi_reduction <add>, %1, %cst [1] : vector<64x128xf32> to vector<64xf32>
    %5 = vector.shape_cast %4 : vector<64xf32> to vector<64x1xf32>
    %cst_3 = arith.constant 1.280000e+02 : f32
    %6 = vector.broadcast %cst_3 : f32 to vector<64x1xf32>
    %7 = arith.divf %5, %6 : vector<64x1xf32>
    %8 = vector.broadcast %7 : vector<64x1xf32> to vector<64x128xf32>
    %9 = arith.subf %1, %8 : vector<64x128xf32>
    %10 = arith.mulf %9, %9 : vector<64x128xf32>
    %cst_4 = arith.constant dense<0.000000e+00> : vector<64xf32>
    %11 = vector.multi_reduction <add>, %10, %cst_4 [1] : vector<64x128xf32> to vector<64xf32>
    %12 = vector.shape_cast %11 : vector<64xf32> to vector<64x1xf32>
    %cst_5 = arith.constant 0.00787401571 : f32
    %13 = vector.broadcast %cst_5 : f32 to vector<64x1xf32>
    %14 = arith.mulf %12, %13 : vector<64x1xf32>
    %15 = math.sqrt %14 : vector<64x1xf32>
    %cst_6 = arith.constant 9.99999997E-7 : f32
    %16 = vector.broadcast %cst_6 : f32 to vector<64x1xf32>
    %17 = arith.addf %15, %16 : vector<64x1xf32>
    %18 = tpu.reciprocal %17 {approx = true} : vector<64x1xf32> -> vector<64x1xf32>
    %19 = vector.broadcast %7 : vector<64x1xf32> to vector<64x128xf32>
    %20 = arith.subf %1, %19 : vector<64x128xf32>
    %21 = vector.broadcast %2 : f32 to vector<64x128xf32>
    %22 = arith.mulf %21, %20 : vector<64x128xf32>
    %23 = vector.broadcast %18 : vector<64x1xf32> to vector<64x128xf32>
    %24 = arith.mulf %22, %23 : vector<64x128xf32>
    %25 = vector.broadcast %3 : f32 to vector<64x128xf32>
    %26 = arith.addf %24, %25 : vector<64x128xf32>
    %27 = arith.truncf %26 : vector<64x128xf32> to vector<64x128xbf16>
    %c0_7 = arith.constant 0 : index
    %c0_8 = arith.constant 0 : index
    %28 = vector.load %arg3[%c0_7, %c0_8] : memref<128x256xbf16, #tpu.memory_space<vmem>>, vector<128x256xbf16>
    %cst_9 = arith.constant dense<0.000000e+00> : vector<64x256xf32>
    %29 = tpu.matmul %27, %28, %cst_9 {dimension_numbers = #tpu.dot_dimension_numbers<[1], [0], [0], [1], [0, 0, 1, 1], [], []>} : vector<64x128xbf16>, vector<128x256xbf16>, vector<64x256xf32> -> vector<64x256xf32>
    %30 = arith.truncf %29 : vector<64x256xf32> to vector<64x256xbf16>
    %31 = vector.extract_strided_slice %30 {offsets = [0, 0], sizes = [64, 32], strides = [1, 1]} : vector<64x256xbf16> to vector<64x32xbf16>
    %c0_10 = arith.constant 0 : index
    %c0_11 = arith.constant 0 : index
    %c0_12 = arith.constant 0 : index
    %c0_13 = arith.constant 0 : index
    %32 = vector.load %arg5[%c0_10, %c0_11, %c0_12, %c0_13] : memref<1x4x64x32xbf16, #tpu.memory_space<vmem>>, vector<1x1x64x32xbf16>
    %33 = vector.shape_cast %32 : vector<1x1x64x32xbf16> to vector<64x32xbf16>
    %34 = vector.shape_cast %31 : vector<64x32xbf16> to vector<1x1x64x32xbf16>
    tpu.vector_store %arg5[%c0_10, %c0_11, %c0_12, %c0_13], %34 {strides = array<i32>} : memref<1x4x64x32xbf16, #tpu.memory_space<vmem>>, vector<1x1x64x32xbf16>,
    %35 = vector.extract_strided_slice %30 {offsets = [0, 128], sizes = [64, 32], strides = [1, 1]} : vector<64x256xbf16> to vector<64x32xbf16>
    %c0_14 = arith.constant 0 : index
    %c0_15 = arith.constant 0 : index
    %c0_16 = arith.constant 0 : index
    %c0_17 = arith.constant 0 : index
    %36 = vector.load %arg6[%c0_14, %c0_15, %c0_16, %c0_17] : memref<1x4x64x32xbf16, #tpu.memory_space<vmem>>, vector<1x1x64x32xbf16>
    %37 = vector.shape_cast %36 : vector<1x1x64x32xbf16> to vector<64x32xbf16>
    %38 = vector.shape_cast %35 : vector<64x32xbf16> to vector<1x1x64x32xbf16>
    tpu.vector_store %arg6[%c0_14, %c0_15, %c0_16, %c0_17], %38 {strides = array<i32>} : memref<1x4x64x32xbf16, #tpu.memory_space<vmem>>, vector<1x1x64x32xbf16>,
    %39 = vector.extract_strided_slice %30 {offsets = [0, 32], sizes = [64, 32], strides = [1, 1]} : vector<64x256xbf16> to vector<64x32xbf16>
    %c0_18 = arith.constant 0 : index
    %c1_19 = arith.constant 1 : index
    %c0_20 = arith.constant 0 : index
    %c0_21 = arith.constant 0 : index
    %40 = vector.load %arg5[%c0_18, %c1_19, %c0_20, %c0_21] : memref<1x4x64x32xbf16, #tpu.memory_space<vmem>>, vector<1x1x64x32xbf16>
    %41 = vector.shape_cast %40 : vector<1x1x64x32xbf16> to vector<64x32xbf16>
    %42 = vector.shape_cast %39 : vector<64x32xbf16> to vector<1x1x64x32xbf16>
    tpu.vector_store %arg5[%c0_18, %c1_19, %c0_20, %c0_21], %42 {strides = array<i32>} : memref<1x4x64x32xbf16, #tpu.memory_space<vmem>>, vector<1x1x64x32xbf16>,
    %43 = vector.extract_strided_slice %30 {offsets = [0, 160], sizes = [64, 32], strides = [1, 1]} : vector<64x256xbf16> to vector<64x32xbf16>
    %c0_22 = arith.constant 0 : index
    %c1_23 = arith.constant 1 : index
    %c0_24 = arith.constant 0 : index
    %c0_25 = arith.constant 0 : index
    %44 = vector.load %arg6[%c0_22, %c1_23, %c0_24, %c0_25] : memref<1x4x64x32xbf16, #tpu.memory_space<vmem>>, vector<1x1x64x32xbf16>
    %45 = vector.shape_cast %44 : vector<1x1x64x32xbf16> to vector<64x32xbf16>
    %46 = vector.shape_cast %43 : vector<64x32xbf16> to vector<1x1x64x32xbf16>
    tpu.vector_store %arg6[%c0_22, %c1_23, %c0_24, %c0_25], %46 {strides = array<i32>} : memref<1x4x64x32xbf16, #tpu.memory_space<vmem>>, vector<1x1x64x32xbf16>,
    %47 = vector.extract_strided_slice %30 {offsets = [0, 64], sizes = [64, 32], strides = [1, 1]} : vector<64x256xbf16> to vector<64x32xbf16>
    %c0_26 = arith.constant 0 : index
    %c2 = arith.constant 2 : index
    %c0_27 = arith.constant 0 : index
    %c0_28 = arith.constant 0 : index
    %48 = vector.load %arg5[%c0_26, %c2, %c0_27, %c0_28] : memref<1x4x64x32xbf16, #tpu.memory_space<vmem>>, vector<1x1x64x32xbf16>
    %49 = vector.shape_cast %48 : vector<1x1x64x32xbf16> to vector<64x32xbf16>
    %50 = vector.shape_cast %47 : vector<64x32xbf16> to vector<1x1x64x32xbf16>
    tpu.vector_store %arg5[%c0_26, %c2, %c0_27, %c0_28], %50 {strides = array<i32>} : memref<1x4x64x32xbf16, #tpu.memory_space<vmem>>, vector<1x1x64x32xbf16>,
    %51 = vector.extract_strided_slice %30 {offsets = [0, 192], sizes = [64, 32], strides = [1, 1]} : vector<64x256xbf16> to vector<64x32xbf16>
    %c0_29 = arith.constant 0 : index
    %c2_30 = arith.constant 2 : index
    %c0_31 = arith.constant 0 : index
    %c0_32 = arith.constant 0 : index
    %52 = vector.load %arg6[%c0_29, %c2_30, %c0_31, %c0_32] : memref<1x4x64x32xbf16, #tpu.memory_space<vmem>>, vector<1x1x64x32xbf16>
    %53 = vector.shape_cast %52 : vector<1x1x64x32xbf16> to vector<64x32xbf16>
    %54 = vector.shape_cast %51 : vector<64x32xbf16> to vector<1x1x64x32xbf16>
    tpu.vector_store %arg6[%c0_29, %c2_30, %c0_31, %c0_32], %54 {strides = array<i32>} : memref<1x4x64x32xbf16, #tpu.memory_space<vmem>>, vector<1x1x64x32xbf16>,
    %55 = vector.extract_strided_slice %30 {offsets = [0, 96], sizes = [64, 32], strides = [1, 1]} : vector<64x256xbf16> to vector<64x32xbf16>
    %c0_33 = arith.constant 0 : index
    %c3 = arith.constant 3 : index
    %c0_34 = arith.constant 0 : index
    %c0_35 = arith.constant 0 : index
    %56 = vector.load %arg5[%c0_33, %c3, %c0_34, %c0_35] : memref<1x4x64x32xbf16, #tpu.memory_space<vmem>>, vector<1x1x64x32xbf16>
    %57 = vector.shape_cast %56 : vector<1x1x64x32xbf16> to vector<64x32xbf16>
    %58 = vector.shape_cast %55 : vector<64x32xbf16> to vector<1x1x64x32xbf16>
    tpu.vector_store %arg5[%c0_33, %c3, %c0_34, %c0_35], %58 {strides = array<i32>} : memref<1x4x64x32xbf16, #tpu.memory_space<vmem>>, vector<1x1x64x32xbf16>,
    %59 = vector.extract_strided_slice %30 {offsets = [0, 224], sizes = [64, 32], strides = [1, 1]} : vector<64x256xbf16> to vector<64x32xbf16>
    %c0_36 = arith.constant 0 : index
    %c3_37 = arith.constant 3 : index
    %c0_38 = arith.constant 0 : index
    %c0_39 = arith.constant 0 : index
    %60 = vector.load %arg6[%c0_36, %c3_37, %c0_38, %c0_39] : memref<1x4x64x32xbf16, #tpu.memory_space<vmem>>, vector<1x1x64x32xbf16>
    %61 = vector.shape_cast %60 : vector<1x1x64x32xbf16> to vector<64x32xbf16>
    %62 = vector.shape_cast %59 : vector<64x32xbf16> to vector<1x1x64x32xbf16>
    tpu.vector_store %arg6[%c0_36, %c3_37, %c0_38, %c0_39], %62 {strides = array<i32>} : memref<1x4x64x32xbf16, #tpu.memory_space<vmem>>, vector<1x1x64x32xbf16>,
    return
  }
  func.func @transform_0(%arg0: i32, %arg1: i32) -> (i32, i32, i32) {
    %c0_i32 = arith.constant 0 : i32
    %c0_i32_0 = arith.constant 0 : i32
    return %arg0, %arg1, %c0_i32 : i32, i32, i32
  }
  func.func @transform_1(%arg0: i32, %arg1: i32) -> (i32, i32) {
    %c0_i32 = arith.constant 0 : i32
    %c0_i32_0 = arith.constant 0 : i32
    %c0_i32_1 = arith.constant 0 : i32
    return %c0_i32, %c0_i32_0 : i32, i32
  }
  func.func @transform_2(%arg0: i32, %arg1: i32) -> i32 {
    %c0_i32 = arith.constant 0 : i32
    %c0_i32_0 = arith.constant 0 : i32
    return %c0_i32 : i32
  }
  func.func @transform_3(%arg0: i32, %arg1: i32) -> (i32, i32, i32, i32) {
    %c0_i32 = arith.constant 0 : i32
    %c0_i32_0 = arith.constant 0 : i32
    %c0_i32_1 = arith.constant 0 : i32
    return %arg0, %c0_i32, %arg1, %c0_i32_0 : i32, i32, i32, i32
  }
  func.func @transform_4(%arg0: i32, %arg1: i32) -> (i32, i32, i32, i32) {
    %c0_i32 = arith.constant 0 : i32
    %c0_i32_0 = arith.constant 0 : i32
    %c0_i32_1 = arith.constant 0 : i32
    return %arg0, %c0_i32, %arg1, %c0_i32_0 : i32, i32, i32, i32
  }
}

module attributes {stable_mosaic.version = 11 : i64} {
  func.func @_kv_project_kernel(%arg0: i32, %arg1: i32, %arg2: memref<1x64x128xf32, #tpu.memory_space<vmem>>, %arg3: memref<128x256xbf16, #tpu.memory_space<vmem>>, %arg4: memref<2xf32, #tpu.memory_space<smem>>, %arg5: memref<1x4x64x32xbf16, #tpu.memory_space<vmem>>, %arg6: memref<1x4x64x32xbf16, #tpu.memory_space<vmem>>) attributes {dimension_semantics = [#tpu.dimension_semantics<parallel>, #tpu.dimension_semantics<parallel>], iteration_bounds = array<i64: 2, 1>, scalar_prefetch = 0 : i64, scratch_operands = 0 : i64, tpu.core_type = #tpu.core_type<tc>, window_params = [{transform_indices = @transform_0, window_bounds = array<i64: 1, 64, 128>}, {pipeline_mode = #tpu.pipeline_mode<synchronous>, transform_indices = @transform_1, window_bounds = array<i64: 128, 256>}, {transform_indices = @transform_2, window_bounds = array<i64: 2>}, {transform_indices = @transform_3, window_bounds = array<i64: 1, 4, 64, 32>}, {transform_indices = @transform_4, window_bounds = array<i64: 1, 4, 64, 32>}]} {
    %c0 = arith.constant 0 : index
    %c0_0 = arith.constant 0 : index
    %c0_1 = arith.constant 0 : index
    %0 = vector.load %arg2[%c0, %c0_0, %c0_1] : memref<1x64x128xf32, #tpu.memory_space<vmem>>, vector<1x64x128xf32>
    %1 = vector.shape_cast %0 : vector<1x64x128xf32> to vector<64x128xf32>
    %c0_2 = arith.constant 0 : index
    %2 = memref.load %arg4[%c0_2] : memref<2xf32, #tpu.memory_space<smem>>
    %c1 = arith.constant 1 : index
    %3 = memref.load %arg4[%c1] : memref<2xf32, #tpu.memory_space<smem>>
    %cst = arith.constant dense<0.000000e+00> : vector<64xf32>
    %4 = vector.multi_reduction <add>, %1, %cst [1] : vector<64x128xf32> to vector<64xf32>
    %5 = vector.shape_cast %4 : vector<64xf32> to vector<64x1xf32>
    %cst_3 = arith.constant 1.280000e+02 : f32
    %6 = vector.broadcast %cst_3 : f32 to vector<64x1xf32>
    %7 = arith.divf %5, %6 : vector<64x1xf32>
    %8 = vector.broadcast %7 : vector<64x1xf32> to vector<64x128xf32>
    %9 = arith.subf %1, %8 : vector<64x128xf32>
    %10 = arith.mulf %9, %9 : vector<64x128xf32>
    %cst_4 = arith.constant dense<0.000000e+00> : vector<64xf32>
    %11 = vector.multi_reduction <add>, %10, %cst_4 [1] : vector<64x128xf32> to vector<64xf32>
    %12 = vector.shape_cast %11 : vector<64xf32> to vector<64x1xf32>
    %cst_5 = arith.constant 0.00787401571 : f32
    %13 = vector.broadcast %cst_5 : f32 to vector<64x1xf32>
    %14 = arith.mulf %12, %13 : vector<64x1xf32>
    %15 = math.sqrt %14 : vector<64x1xf32>
    %cst_6 = arith.constant 9.99999997E-7 : f32
    %16 = vector.broadcast %cst_6 : f32 to vector<64x1xf32>
    %17 = arith.addf %15, %16 : vector<64x1xf32>
    %18 = tpu.reciprocal %17 {approx = true} : vector<64x1xf32> -> vector<64x1xf32>
    %19 = vector.broadcast %7 : vector<64x1xf32> to vector<64x128xf32>
    %20 = arith.subf %1, %19 : vector<64x128xf32>
    %21 = vector.broadcast %2 : f32 to vector<64x128xf32>
    %22 = arith.mulf %21, %20 : vector<64x128xf32>
    %23 = vector.broadcast %18 : vector<64x1xf32> to vector<64x128xf32>
    %24 = arith.mulf %22, %23 : vector<64x128xf32>
    %25 = vector.broadcast %3 : f32 to vector<64x128xf32>
    %26 = arith.addf %24, %25 : vector<64x128xf32>
    %27 = arith.truncf %26 : vector<64x128xf32> to vector<64x128xbf16>
    %c0_7 = arith.constant 0 : index
    %c0_8 = arith.constant 0 : index
    %28 = vector.load %arg3[%c0_7, %c0_8] : memref<128x256xbf16, #tpu.memory_space<vmem>>, vector<128x256xbf16>
    %cst_9 = arith.constant dense<0.000000e+00> : vector<64x256xf32>
    %29 = tpu.matmul %27, %28, %cst_9 {dimension_numbers = #tpu.dot_dimension_numbers<[1], [0], [0], [1], [0, 0, 1, 1], [], []>} : vector<64x128xbf16>, vector<128x256xbf16>, vector<64x256xf32> -> vector<64x256xf32>
    %30 = arith.truncf %29 : vector<64x256xf32> to vector<64x256xbf16>
    %31 = vector.extract_strided_slice %30 {offsets = [0, 0], sizes = [64, 32], strides = [1, 1]} : vector<64x256xbf16> to vector<64x32xbf16>
    %c0_10 = arith.constant 0 : index
    %c0_11 = arith.constant 0 : index
    %c0_12 = arith.constant 0 : index
    %c0_13 = arith.constant 0 : index
    %32 = vector.load %arg5[%c0_10, %c0_11, %c0_12, %c0_13] : memref<1x4x64x32xbf16, #tpu.memory_space<vmem>>, vector<1x1x64x32xbf16>
    %33 = vector.shape_cast %32 : vector<1x1x64x32xbf16> to vector<64x32xbf16>
    %34 = vector.shape_cast %31 : vector<64x32xbf16> to vector<1x1x64x32xbf16>
    tpu.vector_store %arg5[%c0_10, %c0_11, %c0_12, %c0_13], %34 {strides = array<i32>} : memref<1x4x64x32xbf16, #tpu.memory_space<vmem>>, vector<1x1x64x32xbf16>,
    %35 = vector.extract_strided_slice %30 {offsets = [0, 128], sizes = [64, 32], strides = [1, 1]} : vector<64x256xbf16> to vector<64x32xbf16>
    %c0_14 = arith.constant 0 : index
    %c0_15 = arith.constant 0 : index
    %c0_16 = arith.constant 0 : index
    %c0_17 = arith.constant 0 : index
    %36 = vector.load %arg6[%c0_14, %c0_15, %c0_16, %c0_17] : memref<1x4x64x32xbf16, #tpu.memory_space<vmem>>, vector<1x1x64x32xbf16>
    %37 = vector.shape_cast %36 : vector<1x1x64x32xbf16> to vector<64x32xbf16>
    %38 = vector.shape_cast %35 : vector<64x32xbf16> to vector<1x1x64x32xbf16>
    tpu.vector_store %arg6[%c0_14, %c0_15, %c0_16, %c0_17], %38 {strides = array<i32>} : memref<1x4x64x32xbf16, #tpu.memory_space<vmem>>, vector<1x1x64x32xbf16>,
    %39 = vector.extract_strided_slice %30 {offsets = [0, 32], sizes = [64, 32], strides = [1, 1]} : vector<64x256xbf16> to vector<64x32xbf16>
    %c0_18 = arith.constant 0 : index
    %c1_19 = arith.constant 1 : index
    %c0_20 = arith.constant 0 : index
    %c0_21 = arith.constant 0 : index
    %40 = vector.load %arg5[%c0_18, %c1_19, %c0_20, %c0_21] : memref<1x4x64x32xbf16, #tpu.memory_space<vmem>>, vector<1x1x64x32xbf16>
    %41 = vector.shape_cast %40 : vector<1x1x64x32xbf16> to vector<64x32xbf16>
    %42 = vector.shape_cast %39 : vector<64x32xbf16> to vector<1x1x64x32xbf16>
    tpu.vector_store %arg5[%c0_18, %c1_19, %c0_20, %c0_21], %42 {strides = array<i32>} : memref<1x4x64x32xbf16, #tpu.memory_space<vmem>>, vector<1x1x64x32xbf16>,
    %43 = vector.extract_strided_slice %30 {offsets = [0, 160], sizes = [64, 32], strides = [1, 1]} : vector<64x256xbf16> to vector<64x32xbf16>
    %c0_22 = arith.constant 0 : index
    %c1_23 = arith.constant 1 : index
    %c0_24 = arith.constant 0 : index
    %c0_25 = arith.constant 0 : index
    %44 = vector.load %arg6[%c0_22, %c1_23, %c0_24, %c0_25] : memref<1x4x64x32xbf16, #tpu.memory_space<vmem>>, vector<1x1x64x32xbf16>
    %45 = vector.shape_cast %44 : vector<1x1x64x32xbf16> to vector<64x32xbf16>
    %46 = vector.shape_cast %43 : vector<64x32xbf16> to vector<1x1x64x32xbf16>
    tpu.vector_store %arg6[%c0_22, %c1_23, %c0_24, %c0_25], %46 {strides = array<i32>} : memref<1x4x64x32xbf16, #tpu.memory_space<vmem>>, vector<1x1x64x32xbf16>,
    %47 = vector.extract_strided_slice %30 {offsets = [0, 64], sizes = [64, 32], strides = [1, 1]} : vector<64x256xbf16> to vector<64x32xbf16>
    %c0_26 = arith.constant 0 : index
    %c2 = arith.constant 2 : index
    %c0_27 = arith.constant 0 : index
    %c0_28 = arith.constant 0 : index
    %48 = vector.load %arg5[%c0_26, %c2, %c0_27, %c0_28] : memref<1x4x64x32xbf16, #tpu.memory_space<vmem>>, vector<1x1x64x32xbf16>
    %49 = vector.shape_cast %48 : vector<1x1x64x32xbf16> to vector<64x32xbf16>
    %50 = vector.shape_cast %47 : vector<64x32xbf16> to vector<1x1x64x32xbf16>
    tpu.vector_store %arg5[%c0_26, %c2, %c0_27, %c0_28], %50 {strides = array<i32>} : memref<1x4x64x32xbf16, #tpu.memory_space<vmem>>, vector<1x1x64x32xbf16>,
    %51 = vector.extract_strided_slice %30 {offsets = [0, 192], sizes = [64, 32], strides = [1, 1]} : vector<64x256xbf16> to vector<64x32xbf16>
    %c0_29 = arith.constant 0 : index
    %c2_30 = arith.constant 2 : index
    %c0_31 = arith.constant 0 : index
    %c0_32 = arith.constant 0 : index
    %52 = vector.load %arg6[%c0_29, %c2_30, %c0_31, %c0_32] : memref<1x4x64x32xbf16, #tpu.memory_space<vmem>>, vector<1x1x64x32xbf16>
    %53 = vector.shape_cast %52 : vector<1x1x64x32xbf16> to vector<64x32xbf16>
    %54 = vector.shape_cast %51 : vector<64x32xbf16> to vector<1x1x64x32xbf16>
    tpu.vector_store %arg6[%c0_29, %c2_30, %c0_31, %c0_32], %54 {strides = array<i32>} : memref<1x4x64x32xbf16, #tpu.memory_space<vmem>>, vector<1x1x64x32xbf16>,
    %55 = vector.extract_strided_slice %30 {offsets = [0, 96], sizes = [64, 32], strides = [1, 1]} : vector<64x256xbf16> to vector<64x32xbf16>
    %c0_33 = arith.constant 0 : index
    %c3 = arith.constant 3 : index
    %c0_34 = arith.constant 0 : index
    %c0_35 = arith.constant 0 : index
    %56 = vector.load %arg5[%c0_33, %c3, %c0_34, %c0_35] : memref<1x4x64x32xbf16, #tpu.memory_space<vmem>>, vector<1x1x64x32xbf16>
    %57 = vector.shape_cast %56 : vector<1x1x64x32xbf16> to vector<64x32xbf16>
    %58 = vector.shape_cast %55 : vector<64x32xbf16> to vector<1x1x64x32xbf16>
    tpu.vector_store %arg5[%c0_33, %c3, %c0_34, %c0_35], %58 {strides = array<i32>} : memref<1x4x64x32xbf16, #tpu.memory_space<vmem>>, vector<1x1x64x32xbf16>,
    %59 = vector.extract_strided_slice %30 {offsets = [0, 224], sizes = [64, 32], strides = [1, 1]} : vector<64x256xbf16> to vector<64x32xbf16>
    %c0_36 = arith.constant 0 : index
    %c3_37 = arith.constant 3 : index
    %c0_38 = arith.constant 0 : index
    %c0_39 = arith.constant 0 : index
    %60 = vector.load %arg6[%c0_36, %c3_37, %c0_38, %c0_39] : memref<1x4x64x32xbf16, #tpu.memory_space<vmem>>, vector<1x1x64x32xbf16>
    %61 = vector.shape_cast %60 : vector<1x1x64x32xbf16> to vector<64x32xbf16>
    %62 = vector.shape_cast %59 : vector<64x32xbf16> to vector<1x1x64x32xbf16>
    tpu.vector_store %arg6[%c0_36, %c3_37, %c0_38, %c0_39], %62 {strides = array<i32>} : memref<1x4x64x32xbf16, #tpu.memory_space<vmem>>, vector<1x1x64x32xbf16>,
    return
  }
  func.func @transform_0(%arg0: i32, %arg1: i32) -> (i32, i32, i32) {
    %c0_i32 = arith.constant 0 : i32
    %c0_i32_0 = arith.constant 0 : i32
    return %arg0, %arg1, %c0_i32 : i32, i32, i32
  }
  func.func @transform_1(%arg0: i32, %arg1: i32) -> (i32, i32) {
    %c0_i32 = arith.constant 0 : i32
    %c0_i32_0 = arith.constant 0 : i32
    %c0_i32_1 = arith.constant 0 : i32
    return %c0_i32, %c0_i32_0 : i32, i32
  }
  func.func @transform_2(%arg0: i32, %arg1: i32) -> i32 {
    %c0_i32 = arith.constant 0 : i32
    %c0_i32_0 = arith.constant 0 : i32
    return %c0_i32 : i32
  }
  func.func @transform_3(%arg0: i32, %arg1: i32) -> (i32, i32, i32, i32) {
    %c0_i32 = arith.constant 0 : i32
    %c0_i32_0 = arith.constant 0 : i32
    %c0_i32_1 = arith.constant 0 : i32
    return %arg0, %c0_i32, %arg1, %c0_i32_0 : i32, i32, i32, i32
  }
  func.func @transform_4(%arg0: i32, %arg1: i32) -> (i32, i32, i32, i32) {
    %c0_i32 = arith.constant 0 : i32
    %c0_i32_0 = arith.constant 0 : i32
    %c0_i32_1 = arith.constant 0 : i32
    return %arg0, %c0_i32, %arg1, %c0_i32_0 : i32, i32, i32, i32
  }
}

</mosaic_0001>

<llo_original>
// kernel: tpu_custom_call.1
$region0: #{tpu_custom_call.1}
  #allocation0 [shape = 'u32[]', space=smem, size = 0x4, offset = 0x4, fixed_abs, tag = 'smem constant byte address 0x4 - core index']
  #allocation1 [shape = 'u32[144,128]{1,0:T(1,128)}', space=vmem, size = 0x12000, scoped, tag = 'internal scratch']
  %s0 = inlined_call_operand.hbm [shape: f32[2,64,128], index: 0, kind: input, shape index: {}]
  %s1 = inlined_call_operand.hbm [shape: bf16[128,256], index: 1, kind: input, shape index: {}]
  %s2 = inlined_call_operand.vmem [shape: f32[2], index: 2, kind: input, shape index: {}]
  %s3 = inlined_call_operand.vmem [shape: bf16[2,4,64,32], index: 3, kind: output, shape index: {0}]
  %s4 = inlined_call_operand.vmem [shape: bf16[2,4,64,32], index: 4, kind: output, shape index: {1}]
  %5 = xla_tuple %s3, %s4
  %s6 = sld [smem:[#allocation0]]
  $region65: #{tpu_custom_call.1} parent=0
    _
  %s8 = ssub.s32 1, %s6
  %s9 = scalar_select 0, %s8, %s6
  $region1: #{tpu_custom_call.1} parent=0
    #allocation2 [shape = 'u8[65536]{0}', space=vmem, size = 0x10000, scoped, tag = 'input window, operand 0']
    #allocation3 [shape = 's32[2]{0}', space=sflag, size = 0x8, scoped, tag = 'scoped memory for tpu_custom_call.1']
    #allocation4 [shape = 's32[2]{0}', space=sflag, size = 0x8, scoped, tag = 'scoped memory for tpu_custom_call.1']
    #allocation5 [shape = 'u8[65536]{0}', space=vmem, size = 0x10000, scoped, tag = 'input window, operand 1, single buffered']
    #allocation6 [shape = 's32[1]{0}', space=sflag, size = 0x4, scoped, tag = 'scoped memory for tpu_custom_call.1']
    #allocation7 [shape = 'u8[512]{0}', space=smem, size = 0x200, scoped, tag = 'input window, operand 2, single buffered']
    %10 = vsyncpa [#allocation3], 0
    %s11 = scalar_lea.sflag [#allocation3], 1
    %12 = vsyncpa %s11, 0
    %13 = vsyncpa [#allocation6], 0
    %14 = vsyncpa [#allocation4], 0
    loop: start=0, step=1, limit=4
    $region2: #{tpu_custom_call.1} parent=1 // loop_pre_header
      _
    $region3: #{tpu_custom_call.1} parent=1 // loop_header
      %s16 = sphi 0, %s20
      %p17 = scmp.ge.s32.totalorder %s16, 4
      %s23 = sphi 0, %s35
      %s24 = sphi 0, %s31
      %s25 = sphi 0, %s23
      %s26 = sphi 0, %s24
      %s27 = sphi 0, %s25
      %s28 = sphi 0, %s26
      %s40 = sphi 0, %s42
      %s43 = sphi 0, %s40
      %s44 = sphi 0, %s43
      %s60 = sphi 0, %s44
      %s64 = sphi 0, %s64
      %s66 = sphi 0, %s64
      %s67 = sphi 0, %s66
      %s81 = sphi 0, %s67
      %s85 = sphi 0, %s85
      %s87 = sphi 0, %s85
      %s88 = sphi 0, %s87
      %s102 = sphi 0, %s88
      %s110 = sphi 0, %s112
      %s113 = sphi 0, %s110
      %s114 = sphi 0, %s113
      %s130 = sphi 0, %s114
      %s138 = sphi 0, %s140
      %s141 = sphi 0, %s138
      %s142 = sphi 0, %s141
      %s158 = sphi 0, %s142
    $region4: #{tpu_custom_call.1} parent=1 // loop_header_branch
      %19 = sbr.rel (%p17) target = $region8
    $region5: #{tpu_custom_call.1} parent=1 // loop_body
      %s21 = ssub.s32 %s16, 1
      %s22 = ssub.s32 %s16, 2
      %s29 = sadd.s32 1, %s24
      %p30 = scmp.ge.s32.totalorder %s29, 1
      %s31 = scalar_select %p30, 0, %s29
      %s32 = sadd.s32 1, %s23
      %s33 = scalar_select %p30, %s32, %s23
      %p34 = scmp.ge.s32.totalorder %s33, 2
      %s35 = scalar_select %p34, 0, %s33
      %s36 = ssub.s32 %s23, %s35
      %s37 = ssub.s32 %s24, %s31
      %s38 = sor.u32 %s36, %s37
      %p39 = scmp.eq.s32.totalorder %s38, 0
      %s41 = sadd.s32 %s40, 1
      %s42 = scalar_select %p39, %s40, %s41
      %p45 = pneg %p39
      %p46 = scmp.eq.s32.totalorder %s16, 1
      %p47 = por %p45, %p46
      %p48 = scmp.ne.s32.totalorder %s40, %s43
      %p49 = scmp.eq.s32.totalorder %s16, 0
      %p50 = por %p48, %p49
      %p51 = scmp.ne.s32.totalorder %s40, %s43
      %p52 = scmp.eq.s32.totalorder %s21, 1
      %p53 = por %p51, %p52
      %p54 = scmp.ne.s32.totalorder %s43, %s44
      %p55 = scmp.eq.s32.totalorder %s21, 0
      %p56 = por %p54, %p55
      %p57 = scmp.ne.s32.totalorder %s43, %s44
      %p58 = scmp.eq.s32.totalorder %s22, 1
      %p59 = por %p57, %p58
      %p61 = scmp.ne.s32.totalorder %s44, %s60
      %p62 = scmp.eq.s32.totalorder %s22, 0
      %p63 = por %p61, %p62
      %s65 = sadd.s32 %s64, 1
      %p68 = scmp.eq.s32.totalorder %s16, 1
      %p69 = scmp.ne.s32.totalorder %s64, %s66
      %p70 = scmp.eq.s32.totalorder %s16, 0
      %p71 = por %p69, %p70
      %p72 = scmp.ne.s32.totalorder %s64, %s66
      %p73 = scmp.eq.s32.totalorder %s21, 1
      %p74 = por %p72, %p73
      %p75 = scmp.ne.s32.totalorder %s66, %s67
      %p76 = scmp.eq.s32.totalorder %s21, 0
      %p77 = por %p75, %p76
      %p78 = scmp.ne.s32.totalorder %s66, %s67
      %p79 = scmp.eq.s32.totalorder %s22, 1
      %p80 = por %p78, %p79
      %p82 = scmp.ne.s32.totalorder %s67, %s81
      %p83 = scmp.eq.s32.totalorder %s22, 0
      %p84 = por %p82, %p83
      %s86 = sadd.s32 %s85, 1
      %p89 = scmp.eq.s32.totalorder %s16, 1
      %p90 = scmp.ne.s32.totalorder %s85, %s87
      %p91 = scmp.eq.s32.totalorder %s16, 0
      %p92 = por %p90, %p91
      %p93 = scmp.ne.s32.totalorder %s85, %s87
      %p94 = scmp.eq.s32.totalorder %s21, 1
      %p95 = por %p93, %p94
      %p96 = scmp.ne.s32.totalorder %s87, %s88
      %p97 = scmp.eq.s32.totalorder %s21, 0
      %p98 = por %p96, %p97
      %p99 = scmp.ne.s32.totalorder %s87, %s88
      %p100 = scmp.eq.s32.totalorder %s22, 1
      %p101 = por %p99, %p100
      %p103 = scmp.ne.s32.totalorder %s88, %s102
      %p104 = scmp.eq.s32.totalorder %s22, 0
      %p105 = por %p103, %p104
      %s106 = ssub.s32 %s23, %s35
      %s107 = ssub.s32 %s24, %s31
      %s108 = sor.u32 %s106, %s107
      %p109 = scmp.eq.s32.totalorder %s108, 0
      %s111 = sadd.s32 %s110, 1
      %s112 = scalar_select %p109, %s110, %s111
      %p115 = pneg %p109
      %p116 = scmp.eq.s32.totalorder %s16, 1
      %p117 = por %p115, %p116
      %p118 = scmp.ne.s32.totalorder %s110, %s113
      %p119 = scmp.eq.s32.totalorder %s16, 0
      %p120 = por %p118, %p119
      %p121 = scmp.ne.s32.totalorder %s110, %s113
      %p122 = scmp.eq.s32.totalorder %s21, 1
      %p123 = por %p121, %p122
      %p124 = scmp.ne.s32.totalorder %s113, %s114
      %p125 = scmp.eq.s32.totalorder %s21, 0
      %p126 = por %p124, %p125
      %p127 = scmp.ne.s32.totalorder %s113, %s114
      %p128 = scmp.eq.s32.totalorder %s22, 1
      %p129 = por %p127, %p128
      %p131 = scmp.ne.s32.totalorder %s114, %s130
      %p132 = scmp.eq.s32.totalorder %s22, 0
      %p133 = por %p131, %p132
      %s134 = ssub.s32 %s23, %s35
      %s135 = ssub.s32 %s24, %s31
      %s136 = sor.u32 %s134, %s135
      %p137 = scmp.eq.s32.totalorder %s136, 0
      %s139 = sadd.s32 %s138, 1
      %s140 = scalar_select %p137, %s138, %s139
      %p143 = pneg %p137
      %p144 = scmp.eq.s32.totalorder %s16, 1
      %p145 = por %p143, %p144
      %p146 = scmp.ne.s32.totalorder %s138, %s141
      %p147 = scmp.eq.s32.totalorder %s16, 0
      %p148 = por %p146, %p147
      %p149 = scmp.ne.s32.totalorder %s138, %s141
      %p150 = scmp.eq.s32.totalorder %s21, 1
      %p151 = por %p149, %p150
      %p152 = scmp.ne.s32.totalorder %s141, %s142
      %p153 = scmp.eq.s32.totalorder %s21, 0
      %p154 = por %p152, %p153
      %p155 = scmp.ne.s32.totalorder %s141, %s142
      %p156 = scmp.eq.s32.totalorder %s22, 1
      %p157 = por %p155, %p156
      %p159 = scmp.ne.s32.totalorder %s142, %s158
      %p160 = scmp.eq.s32.totalorder %s22, 0
      %p161 = por %p159, %p160
      %p162 = scmp.le.s32.totalorder 1, %s16
      %p163 = scmp.lt.s32.totalorder %s16, 3
      %p164 = pnand %p162, %p163
      %p165 = pneg %p164
      // Predicated region
      $region9: #{tpu_custom_call.1} parent=5 // pred_check
        _
      $region10: #{tpu_custom_call.1} parent=5 // pred_check_branch
        %167 = sbr.rel (%p164) target = $region12
      $region11: #{tpu_custom_call.1} parent=5 // pred_region
        %s168 = ssub.s32 %s16, 1
        // Predicated region
        $region13: #{tpu_custom_call.1} parent=11 // pred_check
          %p169 = pneg %p77
        $region14: #{tpu_custom_call.1} parent=11 // pred_check_branch
          %171 = sbr.rel (%p169) target = $region16
        $region15: #{tpu_custom_call.1} parent=11 // pred_region
          %s173 = ssub.s32 2048, 2048
          %174 = vsyncadd [#allocation6], %s173
          %s175 = sshll.u32 [#allocation5], 4
          %s176 = int_to_ptr.vmem [resolvable:$true] %s175
          %181 = dma.hbm_to_vmem [thread:$0]  %s1, 2048, %s176, [#allocation6], 128, 128, 8
        $region16: #{tpu_custom_call.1} parent=11 // pred_fallthru
          _
        // Predicated region
        $region17: #{tpu_custom_call.1} parent=11 // pred_check
          %p182 = pneg %p98
        $region18: #{tpu_custom_call.1} parent=11 // pred_check_branch
          %184 = sbr.rel (%p182) target = $region20
        $region19: #{tpu_custom_call.1} parent=11 // pred_region
          %s186 = ssub.s32 16, 16
          %187 = vsyncadd [#allocation4], %s186
          %s189 = sshll.u32 %s2, 4
          %s190 = int_to_ptr.vmem [resolvable:$true] %s189
          %192 = dma.vmem_to_smem %s190, 16, [#allocation7], [#allocation4]
        $region20: #{tpu_custom_call.1} parent=11 // pred_fallthru
          _
      $region12: #{tpu_custom_call.1} parent=5 // pred_fallthru
        _
      %p193 = scmp.lt.s32.totalorder %s16, 2
      // Predicated region
      $region21: #{tpu_custom_call.1} parent=5 // pred_check
        %p194 = pneg %p193
      $region22: #{tpu_custom_call.1} parent=5 // pred_check_branch
        %196 = sbr.rel (%p194) target = $region24
      $region23: #{tpu_custom_call.1} parent=5 // pred_region
        // Predicated region
        $region25: #{tpu_custom_call.1} parent=23 // pred_check
          %p197 = pneg %p50
        $region26: #{tpu_custom_call.1} parent=23 // pred_check_branch
          %199 = sbr.rel (%p197) target = $region28
        $region27: #{tpu_custom_call.1} parent=23 // pred_region
          %s200 = sand.u32 %s40, 1
          %s201 = scalar_lea.sflag [#allocation3], %s200
          %s202 = sand.u32 %s40, 1
          %s203 = smul.addr %s202, 64
          %s204 = scalar_lea.vmem [#allocation2], %s203
          %s205 = smul.u32 8, %s24
          %s207 = ssub.s32 1024, 1024
          %208 = vsyncadd %s201, %s207
          %s209 = smul.addr %s23, 8
          %s210 = sadd.s32 %s205, %s209
          %s211 = smul.addr %s210, 128
          %s212 = scalar_lea.hbm %s0, %s211
          %s213 = sshll.u32 %s204, 4
          %s214 = int_to_ptr.vmem [resolvable:$true] %s213
          %219 = dma.hbm_to_vmem [thread:$0]  %s212, 1024, %s214, %s201, 128, 128, 8
        $region28: #{tpu_custom_call.1} parent=23 // pred_fallthru
          _
      $region24: #{tpu_custom_call.1} parent=5 // pred_fallthru
        _
      %p220 = scmp.le.s32.totalorder 1, %s16
      %p221 = scmp.lt.s32.totalorder %s16, 3
      %p222 = pnand %p220, %p221
      %p223 = pneg %p222
      // Predicated region
      $region29: #{tpu_custom_call.1} parent=5 // pred_check
        _
      $region30: #{tpu_custom_call.1} parent=5 // pred_check_branch
        %225 = sbr.rel (%p222) target = $region32
      $region31: #{tpu_custom_call.1} parent=5 // pred_region
        %s226 = ssub.s32 %s16, 1
        %s227 = sand.u32 %s43, 1
        %s228 = scalar_lea.sflag [#allocation3], %s227
        %s229 = sand.u32 %s43, 1
        %s230 = smul.addr %s229, 64
        %s231 = scalar_lea.vmem [#allocation2], %s230
        // Predicated region
        $region33: #{tpu_custom_call.1} parent=31 // pred_check
          %p232 = pneg %p56
        $region34: #{tpu_custom_call.1} parent=31 // pred_check_branch
          %234 = sbr.rel (%p232) target = $region36
        $region35: #{tpu_custom_call.1} parent=31 // pred_region
          %235 = dma.done %s228, 1024
        $region36: #{tpu_custom_call.1} parent=31 // pred_fallthru
          _
        // Predicated region
        $region37: #{tpu_custom_call.1} parent=31 // pred_check
          %p236 = pneg %p77
        $region38: #{tpu_custom_call.1} parent=31 // pred_check_branch
          %238 = sbr.rel (%p236) target = $region40
        $region39: #{tpu_custom_call.1} parent=31 // pred_region
          %239 = dma.done [#allocation6], 2048
        $region40: #{tpu_custom_call.1} parent=31 // pred_fallthru
          _
        // Predicated region
        $region41: #{tpu_custom_call.1} parent=31 // pred_check
          %p240 = pneg %p98
        $region42: #{tpu_custom_call.1} parent=31 // pred_check_branch
          %242 = sbr.rel (%p240) target = $region44
        $region43: #{tpu_custom_call.1} parent=31 // pred_region
          %243 = dma.done [#allocation4], 16
        $region44: #{tpu_custom_call.1} parent=31 // pred_fallthru
          _
        %244 = sfence
        %s245 = sand.u32 %s43, 1
        %s246 = scalar_lea.sflag [#allocation3], %s245
        %s247 = sand.u32 %s43, 1
        %s248 = smul.addr %s247, 64
        %s249 = scalar_lea.vmem [#allocation2], %s248
        %p250 = pneg %p56
        %p251 = pneg %p53
        %p252 = pneg %p77
        %p253 = pneg %p74
        %p254 = pneg %p98
        %p255 = pneg %p95
        %p256 = pneg %p126
        %p257 = pneg %p123
        %s258 = smul.u32 8, %s26
        %p259 = scmp.lt.s32.totalorder %s25, 1
        %s260 = scalar_select %p259, %s25, 1
        %p261 = scmp.lt.s32.totalorder %s258, 7
        %s262 = scalar_select %p261, %s258, 7
        %s263 = smul.addr %s260, 32
        %s264 = sadd.s32 %s262, %s263
        %s265 = smul.addr %s264, 4
        %s266 = scalar_lea.vmem %s3, %s265
        %p267 = pneg %p154
        %p268 = pneg %p151
        %s269 = smul.u32 8, %s26
        %p270 = scmp.lt.s32.totalorder %s25, 1
        %s271 = scalar_select %p270, %s25, 1
        %p272 = scmp.lt.s32.totalorder %s269, 7
        %s273 = scalar_select %p272, %s269, 7
        %s274 = smul.addr %s271, 32
        %s275 = sadd.s32 %s273, %s274
        %s276 = smul.addr %s275, 4
        %s277 = scalar_lea.vmem %s4, %s276
        %s278 = smul.u32 8, %s26
        %s279 = smul.u32 8, %s26
        %p280 = scmp.lt.s32.totalorder %s25, 1
        %s281 = scalar_select %p280, %s25, 1
        %p282 = scmp.lt.s32.totalorder %s279, 7
        %s283 = scalar_select %p282, %s279, 7
        %s284 = smul.addr %s281, 32
        %s285 = sadd.s32 %s283, %s284
        %s286 = smul.addr %s285, 4
        %s287 = scalar_lea.vmem %s3, %s286
        %s288 = smul.u32 8, %s26
        %s289 = smul.u32 8, %s26
        %p290 = scmp.lt.s32.totalorder %s25, 1
        %s291 = scalar_select %p290, %s25, 1
        %p292 = scmp.lt.s32.totalorder %s289, 7
        %s293 = scalar_select %p292, %s289, 7
        %s294 = smul.addr %s291, 32
        %s295 = sadd.s32 %s293, %s294
        %s296 = smul.addr %s295, 4
        %s297 = scalar_lea.vmem %s4, %s296
        %s298 = smul.u32 8, %s26
        %v300 = vld [vmem:[%s231] sm:$0xff]
        %v301 = vld [vmem:[%s231 + $0x8] sm:$0xff]
        %v302 = vld [vmem:[%s231 + $0x10] sm:$0xff]
        %v303 = vld [vmem:[%s231 + $0x18] sm:$0xff]
        %v304 = vld [vmem:[%s231 + $0x20] sm:$0xff]
        %v305 = vld [vmem:[%s231 + $0x28] sm:$0xff]
        %v306 = vld [vmem:[%s231 + $0x30] sm:$0xff]
        %v307 = vld [vmem:[%s231 + $0x38] sm:$0xff]
        %s308 = sld [smem:[#allocation7]]
        %s309 = sld [smem:[#allocation7 + $0x1]]
        %310 = vadd.xlane.f32.xlu0 %v300
        %v311 = vpop.xlane.xlu0 %310
        %312 = vadd.xlane.f32.xlu0 %v301
        %v313 = vpop.xlane.xlu0 %312
        %314 = vadd.xlane.f32.xlu0 %v302
        %v315 = vpop.xlane.xlu0 %314
        %316 = vadd.xlane.f32.xlu0 %v303
        %v317 = vpop.xlane.xlu0 %316
        %318 = vadd.xlane.f32.xlu0 %v304
        %v319 = vpop.xlane.xlu0 %318
        %320 = vadd.xlane.f32.xlu0 %v305
        %v321 = vpop.xlane.xlu0 %320
        %322 = vadd.xlane.f32.xlu0 %v306
        %v323 = vpop.xlane.xlu0 %322
        %324 = vadd.xlane.f32.xlu0 %v307
        %v325 = vpop.xlane.xlu0 %324
        %v326 = vrcp.pop 128.0
        %v327 = vmul.f32 %v311, %v326
        %v328 = vmul.f32 %v313, %v326
        %v329 = vmul.f32 %v315, %v326
        %v330 = vmul.f32 %v317, %v326
        %v331 = vmul.f32 %v319, %v326
        %v332 = vmul.f32 %v321, %v326
        %v333 = vmul.f32 %v323, %v326
        %v334 = vmul.f32 %v325, %v326
        %v335 = vsub.f32 %v300, %v327
        %v336 = vsub.f32 %v301, %v328
        %v337 = vsub.f32 %v302, %v329
        %v338 = vsub.f32 %v303, %v330
        %v339 = vsub.f32 %v304, %v331
        %v340 = vsub.f32 %v305, %v332
        %v341 = vsub.f32 %v306, %v333
        %v342 = vsub.f32 %v307, %v334
        %v343 = vmul.f32 %v335, %v335
        %v344 = vmul.f32 %v336, %v336
        %v345 = vmul.f32 %v337, %v337
        %v346 = vmul.f32 %v338, %v338
        %v347 = vmul.f32 %v339, %v339
        %v348 = vmul.f32 %v340, %v340
        %v349 = vmul.f32 %v341, %v341
        %v350 = vmul.f32 %v342, %v342
        %351 = vadd.xlane.f32.xlu0 %v343
        %v352 = vpop.xlane.xlu0 %351
        %353 = vadd.xlane.f32.xlu0 %v344
        %v354 = vpop.xlane.xlu0 %353
        %355 = vadd.xlane.f32.xlu0 %v345
        %v356 = vpop.xlane.xlu0 %355
        %357 = vadd.xlane.f32.xlu0 %v346
        %v358 = vpop.xlane.xlu0 %357
        %359 = vadd.xlane.f32.xlu0 %v347
        %v360 = vpop.xlane.xlu0 %359
        %361 = vadd.xlane.f32.xlu0 %v348
        %v362 = vpop.xlane.xlu0 %361
        %363 = vadd.xlane.f32.xlu0 %v349
        %v364 = vpop.xlane.xlu0 %363
        %365 = vadd.xlane.f32.xlu0 %v350
        %v366 = vpop.xlane.xlu0 %365
        %v367 = vmul.f32 %v352, 0.007874016
        %v368 = vmul.f32 %v354, 0.007874016
        %v369 = vmul.f32 %v356, 0.007874016
        %v370 = vmul.f32 %v358, 0.007874016
        %v371 = vmul.f32 %v360, 0.007874016
        %v372 = vmul.f32 %v362, 0.007874016
        %v373 = vmul.f32 %v364, 0.007874016
        %v374 = vmul.f32 %v366, 0.007874016
        %v375 = vrsqrt.pop %v367
        %v376 = vmul.f32 %v367, %v375
        %vm377 = vcmp.eq.f32.partialorder %v367, inf
        %v378 = vsel %vm377, %v367, %v376
        %vm379 = vcmp.eq.f32.partialorder %v367, 0.0
        %v380 = vand.u32 %v367, 2147483648
        %v381 = vsel %vm379, %v380, %v378
        %v382 = vrsqrt.pop %v368
        %v383 = vmul.f32 %v368, %v382
        %vm384 = vcmp.eq.f32.partialorder %v368, inf
        %v385 = vsel %vm384, %v368, %v383
        %vm386 = vcmp.eq.f32.partialorder %v368, 0.0
        %v387 = vand.u32 %v368, 2147483648
        %v388 = vsel %vm386, %v387, %v385
        %v389 = vrsqrt.pop %v369
        %v390 = vmul.f32 %v369, %v389
        %vm391 = vcmp.eq.f32.partialorder %v369, inf
        %v392 = vsel %vm391, %v369, %v390
        %vm393 = vcmp.eq.f32.partialorder %v369, 0.0
        %v394 = vand.u32 %v369, 2147483648
        %v395 = vsel %vm393, %v394, %v392
        %v396 = vrsqrt.pop %v370
        %v397 = vmul.f32 %v370, %v396
        %vm398 = vcmp.eq.f32.partialorder %v370, inf
        %v399 = vsel %vm398, %v370, %v397
        %vm400 = vcmp.eq.f32.partialorder %v370, 0.0
        %v401 = vand.u32 %v370, 2147483648
        %v402 = vsel %vm400, %v401, %v399
        %v403 = vrsqrt.pop %v371
        %v404 = vmul.f32 %v371, %v403
        %vm405 = vcmp.eq.f32.partialorder %v371, inf
        %v406 = vsel %vm405, %v371, %v404
        %vm407 = vcmp.eq.f32.partialorder %v371, 0.0
        %v408 = vand.u32 %v371, 2147483648
        %v409 = vsel %vm407, %v408, %v406
        %v410 = vrsqrt.pop %v372
        %v411 = vmul.f32 %v372, %v410
        %vm412 = vcmp.eq.f32.partialorder %v372, inf
        %v413 = vsel %vm412, %v372, %v411
        %vm414 = vcmp.eq.f32.partialorder %v372, 0.0
        %v415 = vand.u32 %v372, 2147483648
        %v416 = vsel %vm414, %v415, %v413
        %v417 = vrsqrt.pop %v373
        %v418 = vmul.f32 %v373, %v417
        %vm419 = vcmp.eq.f32.partialorder %v373, inf
        %v420 = vsel %vm419, %v373, %v418
        %vm421 = vcmp.eq.f32.partialorder %v373, 0.0
        %v422 = vand.u32 %v373, 2147483648
        %v423 = vsel %vm421, %v422, %v420
        %v424 = vrsqrt.pop %v374
        %v425 = vmul.f32 %v374, %v424
        %vm426 = vcmp.eq.f32.partialorder %v374, inf
        %v427 = vsel %vm426, %v374, %v425
        %vm428 = vcmp.eq.f32.partialorder %v374, 0.0
        %v429 = vand.u32 %v374, 2147483648
        %v430 = vsel %vm428, %v429, %v427
        %v431 = vadd.f32 %v381, 1e-06
        %v432 = vadd.f32 %v388, 1e-06
        %v433 = vadd.f32 %v395, 1e-06
        %v434 = vadd.f32 %v402, 1e-06
        %v435 = vadd.f32 %v409, 1e-06
        %v436 = vadd.f32 %v416, 1e-06
        %v437 = vadd.f32 %v423, 1e-06
        %v438 = vadd.f32 %v430, 1e-06
        %v439 = vrcp.pop %v431
        %v440 = vrcp.pop %v432
        %v441 = vrcp.pop %v433
        %v442 = vrcp.pop %v434
        %v443 = vrcp.pop %v435
        %v444 = vrcp.pop %v436
        %v445 = vrcp.pop %v437
        %v446 = vrcp.pop %v438
        %v447 = vstv %s308
        %v448 = vmul.f32 %v447, %v335
        %v449 = vmul.f32 %v447, %v336
        %v450 = vmul.f32 %v447, %v337
        %v451 = vmul.f32 %v447, %v338
        %v452 = vmul.f32 %v447, %v339
        %v453 = vmul.f32 %v447, %v340
        %v454 = vmul.f32 %v447, %v341
        %v455 = vmul.f32 %v447, %v342
        %v456 = vmul.f32 %v448, %v439
        %v457 = vmul.f32 %v449, %v440
        %v458 = vmul.f32 %v450, %v441
        %v459 = vmul.f32 %v451, %v442
        %v460 = vmul.f32 %v452, %v443
        %v461 = vmul.f32 %v453, %v444
        %v462 = vmul.f32 %v454, %v445
        %v463 = vmul.f32 %v455, %v446
        %v464 = vstv %s309
        %v465 = vadd.f32 %v456, %v464
        %v466 = vadd.f32 %v457, %v464
        %v467 = vadd.f32 %v458, %v464
        %v468 = vadd.f32 %v459, %v464
        %v469 = vadd.f32 %v460, %v464
        %v470 = vadd.f32 %v461, %v464
        %v471 = vadd.f32 %v462, %v464
        %v472 = vadd.f32 %v463, %v464
        %v473 = vpack.c.bf16 %v466, %v465
        %v474 = vpack.c.bf16 %v468, %v467
        %v475 = vpack.c.bf16 %v470, %v469
        %v476 = vpack.c.bf16 %v472, %v471
        %v477 = vld [vmem:[#allocation5] sm:$0xff]
        %v478 = vld [vmem:[#allocation5 + $0x8] sm:$0xff]
        %v479 = vld [vmem:[#allocation5 + $0x10] sm:$0xff]
        %v480 = vld [vmem:[#allocation5 + $0x18] sm:$0xff]
        %v481 = vld [vmem:[#allocation5 + $0x20] sm:$0xff]
        %v482 = vld [vmem:[#allocation5 + $0x28] sm:$0xff]
        %v483 = vld [vmem:[#allocation5 + $0x30] sm:$0xff]
        %v484 = vld [vmem:[#allocation5 + $0x38] sm:$0xff]
        %v485 = vld [vmem:[#allocation5 + $0x40] sm:$0xff]
        %v486 = vld [vmem:[#allocation5 + $0x48] sm:$0xff]
        %v487 = vld [vmem:[#allocation5 + $0x50] sm:$0xff]
        %v488 = vld [vmem:[#allocation5 + $0x58] sm:$0xff]
        %v489 = vld [vmem:[#allocation5 + $0x60] sm:$0xff]
        %v490 = vld [vmem:[#allocation5 + $0x68] sm:$0xff]
        %v491 = vld [vmem:[#allocation5 + $0x70] sm:$0xff]
        %v492 = vld [vmem:[#allocation5 + $0x78] sm:$0xff]
        %v509 = vunpack.c.l.b16 %v477
        %v510 = vunpack.c.h.b16 %v477
        %v511 = vunpack.c.l.b16 %v478
        %v512 = vunpack.c.h.b16 %v478
        %v513 = vunpack.c.l.b16 %v479
        %v514 = vunpack.c.h.b16 %v479
        %v515 = vunpack.c.l.b16 %v480
        %v516 = vunpack.c.h.b16 %v480
        %v517 = vunpack.c.l.b16 %v481
        %v518 = vunpack.c.h.b16 %v481
        %v519 = vunpack.c.l.b16 %v482
        %v520 = vunpack.c.h.b16 %v482
        %v521 = vunpack.c.l.b16 %v483
        %v522 = vunpack.c.h.b16 %v483
        %v523 = vunpack.c.l.b16 %v484
        %v524 = vunpack.c.h.b16 %v484
        %v525 = vunpack.c.l.b16 %v485
        %v526 = vunpack.c.h.b16 %v485
        %v527 = vunpack.c.l.b16 %v486
        %v528 = vunpack.c.h.b16 %v486
        %v529 = vunpack.c.l.b16 %v487
        %v530 = vunpack.c.h.b16 %v487
        %v531 = vunpack.c.l.b16 %v488
        %v532 = vunpack.c.h.b16 %v488
        %v533 = vunpack.c.l.b16 %v489
        %v534 = vunpack.c.h.b16 %v489
        %v535 = vunpack.c.l.b16 %v490
        %v536 = vunpack.c.h.b16 %v490
        %v537 = vunpack.c.l.b16 %v491
        %v538 = vunpack.c.h.b16 %v491
        %v539 = vunpack.c.l.b16 %v492
        %v540 = vunpack.c.h.b16 %v492
        %v541 = vpack.c.b16 %v511, %v509
        %v542 = vpack.c.b16 %v512, %v510
        %v543 = vpack.c.b16 %v515, %v513
        %v544 = vpack.c.b16 %v516, %v514
        %v545 = vpack.c.b16 %v519, %v517
        %v546 = vpack.c.b16 %v520, %v518
        %v547 = vpack.c.b16 %v523, %v521
        %v548 = vpack.c.b16 %v524, %v522
        %v549 = vpack.c.b16 %v527, %v525
        %v550 = vpack.c.b16 %v528, %v526
        %v551 = vpack.c.b16 %v531, %v529
        %v552 = vpack.c.b16 %v532, %v530
        %v553 = vpack.c.b16 %v535, %v533
        %v554 = vpack.c.b16 %v536, %v534
        %v555 = vpack.c.b16 %v539, %v537
        %v556 = vpack.c.b16 %v540, %v538
        %573 = vmatprep.subr.bf16.mxu0 %v556
        %574 = vmatpush1.bf16.msra.mxu0 %v555
        %575 = vmatprep.subr.bf16.mxu0 %v554
        %576 = vmatpush1.bf16.msra.mxu0 %v553
        %577 = vmatprep.subr.bf16.mxu0 %v552
        %578 = vmatpush1.bf16.msra.mxu0 %v551
        %579 = vmatprep.subr.bf16.mxu0 %v550
        %580 = vmatpush1.bf16.msra.mxu0 %v549
        %581 = vmatprep.subr.bf16.mxu0 %v548
        %582 = vmatpush1.bf16.msra.mxu0 %v547
        %583 = vmatprep.subr.bf16.mxu0 %v546
        %584 = vmatpush1.bf16.msra.mxu0 %v545
        %585 = vmatprep.subr.bf16.mxu0 %v544
        %586 = vmatpush1.bf16.msra.mxu0 %v543
        %587 = vmatprep.subr.bf16.mxu0 %v542
        %588 = vmatpush1.bf16.msra.mxu0 %v541
        %589 = vmatprep.subr.bf16.mxu0 0
        %590 = vmatpush2.bf16.msra.mxu0 0
        %591 = vmatprep.subr.bf16.mxu0 0
        %592 = vmatpush2.bf16.msra.mxu0 0
        %593 = vmatprep.subr.bf16.mxu0 0
        %594 = vmatpush2.bf16.msra.mxu0 0
        %595 = vmatprep.subr.bf16.mxu0 0
        %596 = vmatpush2.bf16.msra.mxu0 0
        %597 = vmatprep.subr.bf16.mxu0 0
        %598 = vmatpush2.bf16.msra.mxu0 0
        %599 = vmatprep.subr.bf16.mxu0 0
        %600 = vmatpush2.bf16.msra.mxu0 0
        %601 = vmatprep.subr.bf16.mxu0 0
        %602 = vmatpush2.bf16.msra.mxu0 0
        %603 = vmatprep.subr.bf16.mxu0 0
        %604 = vmatpush2.bf16.msra.mxu0 0
        %605 = vmatprep.mubr.bf16.mxu0 0
        %606 = vmatmul.mubr.bf16.gmra.mxu0 %v473
        %v607 = vpop.f32.mrf.mxu0
        %v608 = vadd.f32 0.0, %v607
        %v609 = vpop.f32.mrf.mxu0
        %v610 = vadd.f32 0.0, %v609
        %v611 = vpop.f32.mrf.mxu0
        %v612 = vadd.f32 0.0, %v611
        %v613 = vpop.f32.mrf.mxu0
        %v614 = vadd.f32 0.0, %v613
        %615 = vmatprep.mubr.bf16.mxu0 0
        %616 = vmatmul.mubr.bf16.gmra.mxu0 %v474
        %v617 = vpop.f32.mrf.mxu0
        %v618 = vadd.f32 0.0, %v617
        %v619 = vpop.f32.mrf.mxu0
        %v620 = vadd.f32 0.0, %v619
        %v621 = vpop.f32.mrf.mxu0
        %v622 = vadd.f32 0.0, %v621
        %v623 = vpop.f32.mrf.mxu0
        %v624 = vadd.f32 0.0, %v623
        %625 = vmatprep.mubr.bf16.mxu0 0
        %626 = vmatmul.mubr.bf16.gmra.mxu0 %v475
        %v627 = vpop.f32.mrf.mxu0
        %v628 = vadd.f32 0.0, %v627
        %v629 = vpop.f32.mrf.mxu0
        %v630 = vadd.f32 0.0, %v629
        %v631 = vpop.f32.mrf.mxu0
        %v632 = vadd.f32 0.0, %v631
        %v633 = vpop.f32.mrf.mxu0
        %v634 = vadd.f32 0.0, %v633
        %635 = vmatprep.mubr.bf16.mxu0 0
        %636 = vmatmul.mubr.bf16.gmra.mxu0 %v476
        %v637 = vpop.f32.mrf.mxu0
        %v638 = vadd.f32 0.0, %v637
        %v639 = vpop.f32.mrf.mxu0
        %v640 = vadd.f32 0.0, %v639
        %v641 = vpop.f32.mrf.mxu0
        %v642 = vadd.f32 0.0, %v641
        %v643 = vpop.f32.mrf.mxu0
        %v644 = vadd.f32 0.0, %v643
        %645 = vdwg.mxu0
        %v646 = vpack.c.bf16 %v612, %v608
        %v647 = vpack.c.bf16 %v614, %v610
        %v648 = vpack.c.bf16 %v622, %v618
        %v649 = vpack.c.bf16 %v624, %v620
        %v650 = vpack.c.bf16 %v632, %v628
        %v651 = vpack.c.bf16 %v634, %v630
        %v652 = vpack.c.bf16 %v642, %v638
        %v653 = vpack.c.bf16 %v644, %v640
        %v658 = vunpack.c.l.b16 %v646
        %v659 = vunpack.c.h.b16 %v646
        %v660 = vunpack.c.l.b16 %v648
        %v661 = vunpack.c.h.b16 %v648
        %v662 = vunpack.c.l.b16 %v650
        %v663 = vunpack.c.h.b16 %v650
        %v664 = vunpack.c.l.b16 %v652
        %v665 = vunpack.c.h.b16 %v652
        %v666 = vpack.c.b16 %v658, %v658
        %v667 = vpack.c.b16 %v659, %v659
        %v668 = vpack.c.b16 %v660, %v660
        %v669 = vpack.c.b16 %v661, %v661
        %v670 = vpack.c.b16 %v662, %v662
        %v671 = vpack.c.b16 %v663, %v663
        %v672 = vpack.c.b16 %v664, %v664
        %v673 = vpack.c.b16 %v665, %v665
        %vm682 = vcmask 257024
        %683 = vst.msk [vmem:[%s287] sm:$0xf] %vm682, %v666
        %684 = vst.msk [vmem:[%s287 + $0x4] sm:$0xf] %vm682, %v667
        %685 = vst.msk [vmem:[%s287 + $0x8] sm:$0xf] %vm682, %v668
        %686 = vst.msk [vmem:[%s287 + $0xc] sm:$0xf] %vm682, %v669
        %687 = vst.msk [vmem:[%s287 + $0x10] sm:$0xf] %vm682, %v670
        %688 = vst.msk [vmem:[%s287 + $0x14] sm:$0xf] %vm682, %v671
        %689 = vst.msk [vmem:[%s287 + $0x18] sm:$0xf] %vm682, %v672
        %690 = vst.msk [vmem:[%s287 + $0x1c] sm:$0xf] %vm682, %v673
        %v695 = vunpack.c.l.b16 %v647
        %v696 = vunpack.c.h.b16 %v647
        %v697 = vunpack.c.l.b16 %v649
        %v698 = vunpack.c.h.b16 %v649
        %v699 = vunpack.c.l.b16 %v651
        %v700 = vunpack.c.h.b16 %v651
        %v701 = vunpack.c.l.b16 %v653
        %v702 = vunpack.c.h.b16 %v653
        %v703 = vpack.c.b16 %v695, %v695
        %v704 = vpack.c.b16 %v696, %v696
        %v705 = vpack.c.b16 %v697, %v697
        %v706 = vpack.c.b16 %v698, %v698
        %v707 = vpack.c.b16 %v699, %v699
        %v708 = vpack.c.b16 %v700, %v700
        %v709 = vpack.c.b16 %v701, %v701
        %v710 = vpack.c.b16 %v702, %v702
        %719 = vst.msk [vmem:[%s297] sm:$0xf] %vm682, %v703
        %720 = vst.msk [vmem:[%s297 + $0x4] sm:$0xf] %vm682, %v704
        %721 = vst.msk [vmem:[%s297 + $0x8] sm:$0xf] %vm682, %v705
        %722 = vst.msk [vmem:[%s297 + $0xc] sm:$0xf] %vm682, %v706
        %723 = vst.msk [vmem:[%s297 + $0x10] sm:$0xf] %vm682, %v707
        %724 = vst.msk [vmem:[%s297 + $0x14] sm:$0xf] %vm682, %v708
        %725 = vst.msk [vmem:[%s297 + $0x18] sm:$0xf] %vm682, %v709
        %726 = vst.msk [vmem:[%s297 + $0x1c] sm:$0xf] %vm682, %v710
        %727 = vrot.lane.b32.xlu0 %v666, 96
        %v728 = vpop.permute.xlu0 %727
        %729 = vrot.lane.b32.xlu0 %v667, 96
        %v730 = vpop.permute.xlu0 %729
        %731 = vrot.lane.b32.xlu0 %v668, 96
        %v732 = vpop.permute.xlu0 %731
        %733 = vrot.lane.b32.xlu0 %v669, 96
        %v734 = vpop.permute.xlu0 %733
        %735 = vrot.lane.b32.xlu0 %v670, 96
        %v736 = vpop.permute.xlu0 %735
        %737 = vrot.lane.b32.xlu0 %v671, 96
        %v738 = vpop.permute.xlu0 %737
        %739 = vrot.lane.b32.xlu0 %v672, 96
        %v740 = vpop.permute.xlu0 %739
        %741 = vrot.lane.b32.xlu0 %v673, 96
        %v742 = vpop.permute.xlu0 %741
        %s751 = scalar_lea.vmem %s287, 32
        %752 = vst.msk [vmem:[%s751] sm:$0xf] %vm682, %v728
        %753 = vst.msk [vmem:[%s751 + $0x4] sm:$0xf] %vm682, %v730
        %754 = vst.msk [vmem:[%s751 + $0x8] sm:$0xf] %vm682, %v732
        %755 = vst.msk [vmem:[%s751 + $0xc] sm:$0xf] %vm682, %v734
        %756 = vst.msk [vmem:[%s751 + $0x10] sm:$0xf] %vm682, %v736
        %757 = vst.msk [vmem:[%s751 + $0x14] sm:$0xf] %vm682, %v738
        %758 = vst.msk [vmem:[%s751 + $0x18] sm:$0xf] %vm682, %v740
        %759 = vst.msk [vmem:[%s751 + $0x1c] sm:$0xf] %vm682, %v742
        %760 = vrot.lane.b32.xlu0 %v703, 96
        %v761 = vpop.permute.xlu0 %760
        %762 = vrot.lane.b32.xlu0 %v704, 96
        %v763 = vpop.permute.xlu0 %762
        %764 = vrot.lane.b32.xlu0 %v705, 96
        %v765 = vpop.permute.xlu0 %764
        %766 = vrot.lane.b32.xlu0 %v706, 96
        %v767 = vpop.permute.xlu0 %766
        %768 = vrot.lane.b32.xlu0 %v707, 96
        %v769 = vpop.permute.xlu0 %768
        %770 = vrot.lane.b32.xlu0 %v708, 96
        %v771 = vpop.permute.xlu0 %770
        %772 = vrot.lane.b32.xlu0 %v709, 96
        %v773 = vpop.permute.xlu0 %772
        %774 = vrot.lane.b32.xlu0 %v710, 96
        %v775 = vpop.permute.xlu0 %774
        %s784 = scalar_lea.vmem %s297, 32
        %785 = vst.msk [vmem:[%s784] sm:$0xf] %vm682, %v761
        %786 = vst.msk [vmem:[%s784 + $0x4] sm:$0xf] %vm682, %v763
        %787 = vst.msk [vmem:[%s784 + $0x8] sm:$0xf] %vm682, %v765
        %788 = vst.msk [vmem:[%s784 + $0xc] sm:$0xf] %vm682, %v767
        %789 = vst.msk [vmem:[%s784 + $0x10] sm:$0xf] %vm682, %v769
        %790 = vst.msk [vmem:[%s784 + $0x14] sm:$0xf] %vm682, %v771
        %791 = vst.msk [vmem:[%s784 + $0x18] sm:$0xf] %vm682, %v773
        %792 = vst.msk [vmem:[%s784 + $0x1c] sm:$0xf] %vm682, %v775
        %793 = vrot.lane.b32.xlu0 %v666, 64
        %v794 = vpop.permute.xlu0 %793
        %795 = vrot.lane.b32.xlu0 %v667, 64
        %v796 = vpop.permute.xlu0 %795
        %797 = vrot.lane.b32.xlu0 %v668, 64
        %v798 = vpop.permute.xlu0 %797
        %799 = vrot.lane.b32.xlu0 %v669, 64
        %v800 = vpop.permute.xlu0 %799
        %801 = vrot.lane.b32.xlu0 %v670, 64
        %v802 = vpop.permute.xlu0 %801
        %803 = vrot.lane.b32.xlu0 %v671, 64
        %v804 = vpop.permute.xlu0 %803
        %805 = vrot.lane.b32.xlu0 %v672, 64
        %v806 = vpop.permute.xlu0 %805
        %807 = vrot.lane.b32.xlu0 %v673, 64
        %v808 = vpop.permute.xlu0 %807
        %s817 = scalar_lea.vmem %s287, 64
        %818 = vst.msk [vmem:[%s817] sm:$0xf] %vm682, %v794
        %819 = vst.msk [vmem:[%s817 + $0x4] sm:$0xf] %vm682, %v796
        %820 = vst.msk [vmem:[%s817 + $0x8] sm:$0xf] %vm682, %v798
        %821 = vst.msk [vmem:[%s817 + $0xc] sm:$0xf] %vm682, %v800
        %822 = vst.msk [vmem:[%s817 + $0x10] sm:$0xf] %vm682, %v802
        %823 = vst.msk [vmem:[%s817 + $0x14] sm:$0xf] %vm682, %v804
        %824 = vst.msk [vmem:[%s817 + $0x18] sm:$0xf] %vm682, %v806
        %825 = vst.msk [vmem:[%s817 + $0x1c] sm:$0xf] %vm682, %v808
        %826 = vrot.lane.b32.xlu0 %v703, 64
        %v827 = vpop.permute.xlu0 %826
        %828 = vrot.lane.b32.xlu0 %v704, 64
        %v829 = vpop.permute.xlu0 %828
        %830 = vrot.lane.b32.xlu0 %v705, 64
        %v831 = vpop.permute.xlu0 %830
        %832 = vrot.lane.b32.xlu0 %v706, 64
        %v833 = vpop.permute.xlu0 %832
        %834 = vrot.lane.b32.xlu0 %v707, 64
        %v835 = vpop.permute.xlu0 %834
        %836 = vrot.lane.b32.xlu0 %v708, 64
        %v837 = vpop.permute.xlu0 %836
        %838 = vrot.lane.b32.xlu0 %v709, 64
        %v839 = vpop.permute.xlu0 %838
        %840 = vrot.lane.b32.xlu0 %v710, 64
        %v841 = vpop.permute.xlu0 %840
        %s850 = scalar_lea.vmem %s297, 64
        %851 = vst.msk [vmem:[%s850] sm:$0xf] %vm682, %v827
        %852 = vst.msk [vmem:[%s850 + $0x4] sm:$0xf] %vm682, %v829
        %853 = vst.msk [vmem:[%s850 + $0x8] sm:$0xf] %vm682, %v831
        %854 = vst.msk [vmem:[%s850 + $0xc] sm:$0xf] %vm682, %v833
        %855 = vst.msk [vmem:[%s850 + $0x10] sm:$0xf] %vm682, %v835
        %856 = vst.msk [vmem:[%s850 + $0x14] sm:$0xf] %vm682, %v837
        %857 = vst.msk [vmem:[%s850 + $0x18] sm:$0xf] %vm682, %v839
        %858 = vst.msk [vmem:[%s850 + $0x1c] sm:$0xf] %vm682, %v841
        %859 = vrot.lane.b32.xlu0 %v666, 32
        %v860 = vpop.permute.xlu0 %859
        %861 = vrot.lane.b32.xlu0 %v667, 32
        %v862 = vpop.permute.xlu0 %861
        %863 = vrot.lane.b32.xlu0 %v668, 32
        %v864 = vpop.permute.xlu0 %863
        %865 = vrot.lane.b32.xlu0 %v669, 32
        %v866 = vpop.permute.xlu0 %865
        %867 = vrot.lane.b32.xlu0 %v670, 32
        %v868 = vpop.permute.xlu0 %867
        %869 = vrot.lane.b32.xlu0 %v671, 32
        %v870 = vpop.permute.xlu0 %869
        %871 = vrot.lane.b32.xlu0 %v672, 32
        %v872 = vpop.permute.xlu0 %871
        %873 = vrot.lane.b32.xlu0 %v673, 32
        %v874 = vpop.permute.xlu0 %873
        %s883 = scalar_lea.vmem %s287, 96
        %884 = vst.msk [vmem:[%s883] sm:$0xf] %vm682, %v860
        %885 = vst.msk [vmem:[%s883 + $0x4] sm:$0xf] %vm682, %v862
        %886 = vst.msk [vmem:[%s883 + $0x8] sm:$0xf] %vm682, %v864
        %887 = vst.msk [vmem:[%s883 + $0xc] sm:$0xf] %vm682, %v866
        %888 = vst.msk [vmem:[%s883 + $0x10] sm:$0xf] %vm682, %v868
        %889 = vst.msk [vmem:[%s883 + $0x14] sm:$0xf] %vm682, %v870
        %890 = vst.msk [vmem:[%s883 + $0x18] sm:$0xf] %vm682, %v872
        %891 = vst.msk [vmem:[%s883 + $0x1c] sm:$0xf] %vm682, %v874
        %892 = vrot.lane.b32.xlu0 %v703, 32
        %v893 = vpop.permute.xlu0 %892
        %894 = vrot.lane.b32.xlu0 %v704, 32
        %v895 = vpop.permute.xlu0 %894
        %896 = vrot.lane.b32.xlu0 %v705, 32
        %v897 = vpop.permute.xlu0 %896
        %898 = vrot.lane.b32.xlu0 %v706, 32
        %v899 = vpop.permute.xlu0 %898
        %900 = vrot.lane.b32.xlu0 %v707, 32
        %v901 = vpop.permute.xlu0 %900
        %902 = vrot.lane.b32.xlu0 %v708, 32
        %v903 = vpop.permute.xlu0 %902
        %904 = vrot.lane.b32.xlu0 %v709, 32
        %v905 = vpop.permute.xlu0 %904
        %906 = vrot.lane.b32.xlu0 %v710, 32
        %v907 = vpop.permute.xlu0 %906
        %s916 = scalar_lea.vmem %s297, 96
        %917 = vst.msk [vmem:[%s916] sm:$0xf] %vm682, %v893
        %918 = vst.msk [vmem:[%s916 + $0x4] sm:$0xf] %vm682, %v895
        %919 = vst.msk [vmem:[%s916 + $0x8] sm:$0xf] %vm682, %v897
        %920 = vst.msk [vmem:[%s916 + $0xc] sm:$0xf] %vm682, %v899
        %921 = vst.msk [vmem:[%s916 + $0x10] sm:$0xf] %vm682, %v901
        %922 = vst.msk [vmem:[%s916 + $0x14] sm:$0xf] %vm682, %v903
        %923 = vst.msk [vmem:[%s916 + $0x18] sm:$0xf] %vm682, %v905
        %924 = vst.msk [vmem:[%s916 + $0x1c] sm:$0xf] %vm682, %v907
        %s925 = smul.u32 8, %s26
        %p926 = scmp.lt.s32.totalorder %s25, 1
        %s927 = scalar_select %p926, %s25, 1
        %p928 = scmp.lt.s32.totalorder %s925, 7
        %s929 = scalar_select %p928, %s925, 7
        %s930 = smul.addr %s927, 32
        %s931 = sadd.s32 %s929, %s930
        %s932 = smul.addr %s931, 4
        %s933 = scalar_lea.vmem %s3, %s932
        %s934 = smul.u32 8, %s26
        %p935 = scmp.lt.s32.totalorder %s25, 1
        %s936 = scalar_select %p935, %s25, 1
        %p937 = scmp.lt.s32.totalorder %s934, 7
        %s938 = scalar_select %p937, %s934, 7
        %s939 = smul.addr %s936, 32
        %s940 = sadd.s32 %s938, %s939
        %s941 = smul.addr %s940, 4
        %s942 = scalar_lea.vmem %s4, %s941
        // Predicated region
        $region45: #{tpu_custom_call.1} parent=31 // pred_check
          %p943 = pneg %p123
        $region46: #{tpu_custom_call.1} parent=31 // pred_check_branch
          %945 = sbr.rel (%p943) target = $region48
        $region47: #{tpu_custom_call.1} parent=31 // pred_region
          %s946 = smul.u32 8, %s26
        $region48: #{tpu_custom_call.1} parent=31 // pred_fallthru
          _
        // Predicated region
        $region49: #{tpu_custom_call.1} parent=31 // pred_check
          %p947 = pneg %p151
        $region50: #{tpu_custom_call.1} parent=31 // pred_check_branch
          %949 = sbr.rel (%p947) target = $region52
        $region51: #{tpu_custom_call.1} parent=31 // pred_region
          %s950 = smul.u32 8, %s26
        $region52: #{tpu_custom_call.1} parent=31 // pred_fallthru
          _
      $region32: #{tpu_custom_call.1} parent=5 // pred_fallthru
        _
      %p951 = scmp.le.s32.totalorder 2, %s16
      // Predicated region
      $region53: #{tpu_custom_call.1} parent=5 // pred_check
        %p952 = pneg %p951
      $region54: #{tpu_custom_call.1} parent=5 // pred_check_branch
        %954 = sbr.rel (%p952) target = $region56
      $region55: #{tpu_custom_call.1} parent=5 // pred_region
        %s955 = ssub.s32 %s16, 2
        // Predicated region
        $region57: #{tpu_custom_call.1} parent=55 // pred_check
          %p956 = pneg %p129
        $region58: #{tpu_custom_call.1} parent=55 // pred_check_branch
          %958 = sbr.rel (%p956) target = $region60
        $region59: #{tpu_custom_call.1} parent=55 // pred_region
          %s959 = smul.u32 8, %s28
          %p960 = scmp.lt.s32.totalorder %s27, 1
          %s961 = scalar_select %p960, %s27, 1
          %p962 = scmp.lt.s32.totalorder %s959, 7
          %s963 = scalar_select %p962, %s959, 7
          %s964 = smul.addr %s961, 32
          %s965 = sadd.s32 %s963, %s964
          %s966 = smul.addr %s965, 4
          %s967 = scalar_lea.vmem %s3, %s966
        $region60: #{tpu_custom_call.1} parent=55 // pred_fallthru
          _
        // Predicated region
        $region61: #{tpu_custom_call.1} parent=55 // pred_check
          %p968 = pneg %p157
        $region62: #{tpu_custom_call.1} parent=55 // pred_check_branch
          %970 = sbr.rel (%p968) target = $region64
        $region63: #{tpu_custom_call.1} parent=55 // pred_region
          %s971 = smul.u32 8, %s28
          %p972 = scmp.lt.s32.totalorder %s27, 1
          %s973 = scalar_select %p972, %s27, 1
          %p974 = scmp.lt.s32.totalorder %s971, 7
          %s975 = scalar_select %p974, %s971, 7
          %s976 = smul.addr %s973, 32
          %s977 = sadd.s32 %s975, %s976
          %s978 = smul.addr %s977, 4
          %s979 = scalar_lea.vmem %s4, %s978
        $region64: #{tpu_custom_call.1} parent=55 // pred_fallthru
          _
      $region56: #{tpu_custom_call.1} parent=5 // pred_fallthru
        _
    $region6: #{tpu_custom_call.1} parent=1 // loop_footer
      %s20 = sadd.s32 1, %s16
    $region7: #{tpu_custom_call.1} parent=1 // loop_footer_branch
      %15 = sbr.rel target = $region3
    $region8: #{tpu_custom_call.1} parent=1 // loop_exit
      _
    %980 = vsyncpa [#allocation3], 1
    %s981 = scalar_lea.sflag [#allocation3], 1
    %982 = vsyncpa %s981, 1
    %983 = vsyncpa [#allocation6], 1
    %984 = vsyncpa [#allocation4], 1
    %s985 = scalar_lea.sflag [#allocation4], 1
    %986 = vsyncpa %s985, 1

// kernel: tpu_custom_call.1
$region0: #{tpu_custom_call.1}
  #allocation0 [shape = 'u32[]', space=smem, size = 0x4, offset = 0x4, fixed_abs, tag = 'smem constant byte address 0x4 - core index']
  #allocation1 [shape = 'u32[144,128]{1,0:T(1,128)}', space=vmem, size = 0x12000, scoped, tag = 'internal scratch']
  %s0 = inlined_call_operand.hbm [shape: f32[2,64,128], index: 0, kind: input, shape index: {}]
  %s1 = inlined_call_operand.hbm [shape: bf16[128,256], index: 1, kind: input, shape index: {}]
  %s2 = inlined_call_operand.vmem [shape: f32[2], index: 2, kind: input, shape index: {}]
  %s3 = inlined_call_operand.vmem [shape: bf16[2,4,64,32], index: 3, kind: output, shape index: {0}]
  %s4 = inlined_call_operand.vmem [shape: bf16[2,4,64,32], index: 4, kind: output, shape index: {1}]
  %5 = xla_tuple %s3, %s4
  %s6 = sld [smem:[#allocation0]]
  $region65: #{tpu_custom_call.1} parent=0
    _
  %s8 = ssub.s32 1, %s6
  %s9 = scalar_select 0, %s8, %s6
  $region1: #{tpu_custom_call.1} parent=0
    #allocation2 [shape = 'u8[65536]{0}', space=vmem, size = 0x10000, scoped, tag = 'input window, operand 0']
    #allocation3 [shape = 's32[2]{0}', space=sflag, size = 0x8, scoped, tag = 'scoped memory for tpu_custom_call.1']
    #allocation4 [shape = 's32[2]{0}', space=sflag, size = 0x8, scoped, tag = 'scoped memory for tpu_custom_call.1']
    #allocation5 [shape = 'u8[65536]{0}', space=vmem, size = 0x10000, scoped, tag = 'input window, operand 1, single buffered']
    #allocation6 [shape = 's32[1]{0}', space=sflag, size = 0x4, scoped, tag = 'scoped memory for tpu_custom_call.1']
    #allocation7 [shape = 'u8[512]{0}', space=smem, size = 0x200, scoped, tag = 'input window, operand 2, single buffered']
    %10 = vsyncpa [#allocation3], 0
    %s11 = scalar_lea.sflag [#allocation3], 1
    %12 = vsyncpa %s11, 0
    %13 = vsyncpa [#allocation6], 0
    %14 = vsyncpa [#allocation4], 0
    loop: start=0, step=1, limit=4
    $region2: #{tpu_custom_call.1} parent=1 // loop_pre_header
      _
    $region3: #{tpu_custom_call.1} parent=1 // loop_header
      %s16 = sphi 0, %s20
      %p17 = scmp.ge.s32.totalorder %s16, 4
      %s23 = sphi 0, %s35
      %s24 = sphi 0, %s31
      %s25 = sphi 0, %s23
      %s26 = sphi 0, %s24
      %s27 = sphi 0, %s25
      %s28 = sphi 0, %s26
      %s40 = sphi 0, %s42
      %s43 = sphi 0, %s40
      %s44 = sphi 0, %s43
      %s60 = sphi 0, %s44
      %s64 = sphi 0, %s64
      %s66 = sphi 0, %s64
      %s67 = sphi 0, %s66
      %s81 = sphi 0, %s67
      %s85 = sphi 0, %s85
      %s87 = sphi 0, %s85
      %s88 = sphi 0, %s87
      %s102 = sphi 0, %s88
      %s110 = sphi 0, %s112
      %s113 = sphi 0, %s110
      %s114 = sphi 0, %s113
      %s130 = sphi 0, %s114
      %s138 = sphi 0, %s140
      %s141 = sphi 0, %s138
      %s142 = sphi 0, %s141
      %s158 = sphi 0, %s142
    $region4: #{tpu_custom_call.1} parent=1 // loop_header_branch
      %19 = sbr.rel (%p17) target = $region8
    $region5: #{tpu_custom_call.1} parent=1 // loop_body
      %s21 = ssub.s32 %s16, 1
      %s22 = ssub.s32 %s16, 2
      %s29 = sadd.s32 1, %s24
      %p30 = scmp.ge.s32.totalorder %s29, 1
      %s31 = scalar_select %p30, 0, %s29
      %s32 = sadd.s32 1, %s23
      %s33 = scalar_select %p30, %s32, %s23
      %p34 = scmp.ge.s32.totalorder %s33, 2
      %s35 = scalar_select %p34, 0, %s33
      %s36 = ssub.s32 %s23, %s35
      %s37 = ssub.s32 %s24, %s31
      %s38 = sor.u32 %s36, %s37
      %p39 = scmp.eq.s32.totalorder %s38, 0
      %s41 = sadd.s32 %s40, 1
      %s42 = scalar_select %p39, %s40, %s41
      %p45 = pneg %p39
      %p46 = scmp.eq.s32.totalorder %s16, 1
      %p47 = por %p45, %p46
      %p48 = scmp.ne.s32.totalorder %s40, %s43
      %p49 = scmp.eq.s32.totalorder %s16, 0
      %p50 = por %p48, %p49
      %p51 = scmp.ne.s32.totalorder %s40, %s43
      %p52 = scmp.eq.s32.totalorder %s21, 1
      %p53 = por %p51, %p52
      %p54 = scmp.ne.s32.totalorder %s43, %s44
      %p55 = scmp.eq.s32.totalorder %s21, 0
      %p56 = por %p54, %p55
      %p57 = scmp.ne.s32.totalorder %s43, %s44
      %p58 = scmp.eq.s32.totalorder %s22, 1
      %p59 = por %p57, %p58
      %p61 = scmp.ne.s32.totalorder %s44, %s60
      %p62 = scmp.eq.s32.totalorder %s22, 0
      %p63 = por %p61, %p62
      %s65 = sadd.s32 %s64, 1
      %p68 = scmp.eq.s32.totalorder %s16, 1
      %p69 = scmp.ne.s32.totalorder %s64, %s66
      %p70 = scmp.eq.s32.totalorder %s16, 0
      %p71 = por %p69, %p70
      %p72 = scmp.ne.s32.totalorder %s64, %s66
      %p73 = scmp.eq.s32.totalorder %s21, 1
      %p74 = por %p72, %p73
      %p75 = scmp.ne.s32.totalorder %s66, %s67
      %p76 = scmp.eq.s32.totalorder %s21, 0
      %p77 = por %p75, %p76
      %p78 = scmp.ne.s32.totalorder %s66, %s67
      %p79 = scmp.eq.s32.totalorder %s22, 1
      %p80 = por %p78, %p79
      %p82 = scmp.ne.s32.totalorder %s67, %s81
      %p83 = scmp.eq.s32.totalorder %s22, 0
      %p84 = por %p82, %p83
      %s86 = sadd.s32 %s85, 1
      %p89 = scmp.eq.s32.totalorder %s16, 1
      %p90 = scmp.ne.s32.totalorder %s85, %s87
      %p91 = scmp.eq.s32.totalorder %s16, 0
      %p92 = por %p90, %p91
      %p93 = scmp.ne.s32.totalorder %s85, %s87
      %p94 = scmp.eq.s32.totalorder %s21, 1
      %p95 = por %p93, %p94
      %p96 = scmp.ne.s32.totalorder %s87, %s88
      %p97 = scmp.eq.s32.totalorder %s21, 0
      %p98 = por %p96, %p97
      %p99 = scmp.ne.s32.totalorder %s87, %s88
      %p100 = scmp.eq.s32.totalorder %s22, 1
      %p101 = por %p99, %p100
      %p103 = scmp.ne.s32.totalorder %s88, %s102
      %p104 = scmp.eq.s32.totalorder %s22, 0
      %p105 = por %p103, %p104
      %s106 = ssub.s32 %s23, %s35
      %s107 = ssub.s32 %s24, %s31
      %s108 = sor.u32 %s106, %s107
      %p109 = scmp.eq.s32.totalorder %s108, 0
      %s111 = sadd.s32 %s110, 1
      %s112 = scalar_select %p109, %s110, %s111
      %p115 = pneg %p109
      %p116 = scmp.eq.s32.totalorder %s16, 1
      %p117 = por %p115, %p116
      %p118 = scmp.ne.s32.totalorder %s110, %s113
      %p119 = scmp.eq.s32.totalorder %s16, 0
      %p120 = por %p118, %p119
      %p121 = scmp.ne.s32.totalorder %s110, %s113
      %p122 = scmp.eq.s32.totalorder %s21, 1
      %p123 = por %p121, %p122
      %p124 = scmp.ne.s32.totalorder %s113, %s114
      %p125 = scmp.eq.s32.totalorder %s21, 0
      %p126 = por %p124, %p125
      %p127 = scmp.ne.s32.totalorder %s113, %s114
      %p128 = scmp.eq.s32.totalorder %s22, 1
      %p129 = por %p127, %p128
      %p131 = scmp.ne.s32.totalorder %s114, %s130
      %p132 = scmp.eq.s32.totalorder %s22, 0
      %p133 = por %p131, %p132
      %s134 = ssub.s32 %s23, %s35
      %s135 = ssub.s32 %s24, %s31
      %s136 = sor.u32 %s134, %s135
      %p137 = scmp.eq.s32.totalorder %s136, 0
      %s139 = sadd.s32 %s138, 1
      %s140 = scalar_select %p137, %s138, %s139
      %p143 = pneg %p137
      %p144 = scmp.eq.s32.totalorder %s16, 1
      %p145 = por %p143, %p144
      %p146 = scmp.ne.s32.totalorder %s138, %s141
      %p147 = scmp.eq.s32.totalorder %s16, 0
      %p148 = por %p146, %p147
      %p149 = scmp.ne.s32.totalorder %s138, %s141
      %p150 = scmp.eq.s32.totalorder %s21, 1
      %p151 = por %p149, %p150
      %p152 = scmp.ne.s32.totalorder %s141, %s142
      %p153 = scmp.eq.s32.totalorder %s21, 0
      %p154 = por %p152, %p153
      %p155 = scmp.ne.s32.totalorder %s141, %s142
      %p156 = scmp.eq.s32.totalorder %s22, 1
      %p157 = por %p155, %p156
      %p159 = scmp.ne.s32.totalorder %s142, %s158
      %p160 = scmp.eq.s32.totalorder %s22, 0
      %p161 = por %p159, %p160
      %p162 = scmp.le.s32.totalorder 1, %s16
      %p163 = scmp.lt.s32.totalorder %s16, 3
      %p164 = pnand %p162, %p163
      %p165 = pneg %p164
      // Predicated region
      $region9: #{tpu_custom_call.1} parent=5 // pred_check
        _
      $region10: #{tpu_custom_call.1} parent=5 // pred_check_branch
        %167 = sbr.rel (%p164) target = $region12
      $region11: #{tpu_custom_call.1} parent=5 // pred_region
        %s168 = ssub.s32 %s16, 1
        // Predicated region
        $region13: #{tpu_custom_call.1} parent=11 // pred_check
          %p169 = pneg %p77
        $region14: #{tpu_custom_call.1} parent=11 // pred_check_branch
          %171 = sbr.rel (%p169) target = $region16
        $region15: #{tpu_custom_call.1} parent=11 // pred_region
          %s173 = ssub.s32 2048, 2048
          %174 = vsyncadd [#allocation6], %s173
          %s175 = sshll.u32 [#allocation5], 4
          %s176 = int_to_ptr.vmem [resolvable:$true] %s175
          %181 = dma.hbm_to_vmem [thread:$0]  %s1, 2048, %s176, [#allocation6], 128, 128, 8
        $region16: #{tpu_custom_call.1} parent=11 // pred_fallthru
          _
        // Predicated region
        $region17: #{tpu_custom_call.1} parent=11 // pred_check
          %p182 = pneg %p98
        $region18: #{tpu_custom_call.1} parent=11 // pred_check_branch
          %184 = sbr.rel (%p182) target = $region20
        $region19: #{tpu_custom_call.1} parent=11 // pred_region
          %s186 = ssub.s32 16, 16
          %187 = vsyncadd [#allocation4], %s186
          %s189 = sshll.u32 %s2, 4
          %s190 = int_to_ptr.vmem [resolvable:$true] %s189
          %192 = dma.vmem_to_smem %s190, 16, [#allocation7], [#allocation4]
        $region20: #{tpu_custom_call.1} parent=11 // pred_fallthru
          _
      $region12: #{tpu_custom_call.1} parent=5 // pred_fallthru
        _
      %p193 = scmp.lt.s32.totalorder %s16, 2
      // Predicated region
      $region21: #{tpu_custom_call.1} parent=5 // pred_check
        %p194 = pneg %p193
      $region22: #{tpu_custom_call.1} parent=5 // pred_check_branch
        %196 = sbr.rel (%p194) target = $region24
      $region23: #{tpu_custom_call.1} parent=5 // pred_region
        // Predicated region
        $region25: #{tpu_custom_call.1} parent=23 // pred_check
          %p197 = pneg %p50
        $region26: #{tpu_custom_call.1} parent=23 // pred_check_branch
          %199 = sbr.rel (%p197) target = $region28
        $region27: #{tpu_custom_call.1} parent=23 // pred_region
          %s200 = sand.u32 %s40, 1
          %s201 = scalar_lea.sflag [#allocation3], %s200
          %s202 = sand.u32 %s40, 1
          %s203 = smul.addr %s202, 64
          %s204 = scalar_lea.vmem [#allocation2], %s203
          %s205 = smul.u32 8, %s24
          %s207 = ssub.s32 1024, 1024
          %208 = vsyncadd %s201, %s207
          %s209 = smul.addr %s23, 8
          %s210 = sadd.s32 %s205, %s209
          %s211 = smul.addr %s210, 128
          %s212 = scalar_lea.hbm %s0, %s211
          %s213 = sshll.u32 %s204, 4
          %s214 = int_to_ptr.vmem [resolvable:$true] %s213
          %219 = dma.hbm_to_vmem [thread:$0]  %s212, 1024, %s214, %s201, 128, 128, 8
        $region28: #{tpu_custom_call.1} parent=23 // pred_fallthru
          _
      $region24: #{tpu_custom_call.1} parent=5 // pred_fallthru
        _
      %p220 = scmp.le.s32.totalorder 1, %s16
      %p221 = scmp.lt.s32.totalorder %s16, 3
      %p222 = pnand %p220, %p221
      %p223 = pneg %p222
      // Predicated region
      $region29: #{tpu_custom_call.1} parent=5 // pred_check
        _
      $region30: #{tpu_custom_call.1} parent=5 // pred_check_branch
        %225 = sbr.rel (%p222) target = $region32
      $region31: #{tpu_custom_call.1} parent=5 // pred_region
        %s226 = ssub.s32 %s16, 1
        %s227 = sand.u32 %s43, 1
        %s228 = scalar_lea.sflag [#allocation3], %s227
        %s229 = sand.u32 %s43, 1
        %s230 = smul.addr %s229, 64
        %s231 = scalar_lea.vmem [#allocation2], %s230
        // Predicated region
        $region33: #{tpu_custom_call.1} parent=31 // pred_check
          %p232 = pneg %p56
        $region34: #{tpu_custom_call.1} parent=31 // pred_check_branch
          %234 = sbr.rel (%p232) target = $region36
        $region35: #{tpu_custom_call.1} parent=31 // pred_region
          %235 = dma.done %s228, 1024
        $region36: #{tpu_custom_call.1} parent=31 // pred_fallthru
          _
        // Predicated region
        $region37: #{tpu_custom_call.1} parent=31 // pred_check
          %p236 = pneg %p77
        $region38: #{tpu_custom_call.1} parent=31 // pred_check_branch
          %238 = sbr.rel (%p236) target = $region40
        $region39: #{tpu_custom_call.1} parent=31 // pred_region
          %239 = dma.done [#allocation6], 2048
        $region40: #{tpu_custom_call.1} parent=31 // pred_fallthru
          _
        // Predicated region
        $region41: #{tpu_custom_call.1} parent=31 // pred_check
          %p240 = pneg %p98
        $region42: #{tpu_custom_call.1} parent=31 // pred_check_branch
          %242 = sbr.rel (%p240) target = $region44
        $region43: #{tpu_custom_call.1} parent=31 // pred_region
          %243 = dma.done [#allocation4], 16
        $region44: #{tpu_custom_call.1} parent=31 // pred_fallthru
          _
        %244 = sfence
        %s245 = sand.u32 %s43, 1
        %s246 = scalar_lea.sflag [#allocation3], %s245
        %s247 = sand.u32 %s43, 1
        %s248 = smul.addr %s247, 64
        %s249 = scalar_lea.vmem [#allocation2], %s248
        %p250 = pneg %p56
        %p251 = pneg %p53
        %p252 = pneg %p77
        %p253 = pneg %p74
        %p254 = pneg %p98
        %p255 = pneg %p95
        %p256 = pneg %p126
        %p257 = pneg %p123
        %s258 = smul.u32 8, %s26
        %p259 = scmp.lt.s32.totalorder %s25, 1
        %s260 = scalar_select %p259, %s25, 1
        %p261 = scmp.lt.s32.totalorder %s258, 7
        %s262 = scalar_select %p261, %s258, 7
        %s263 = smul.addr %s260, 32
        %s264 = sadd.s32 %s262, %s263
        %s265 = smul.addr %s264, 4
        %s266 = scalar_lea.vmem %s3, %s265
        %p267 = pneg %p154
        %p268 = pneg %p151
        %s269 = smul.u32 8, %s26
        %p270 = scmp.lt.s32.totalorder %s25, 1
        %s271 = scalar_select %p270, %s25, 1
        %p272 = scmp.lt.s32.totalorder %s269, 7
        %s273 = scalar_select %p272, %s269, 7
        %s274 = smul.addr %s271, 32
        %s275 = sadd.s32 %s273, %s274
        %s276 = smul.addr %s275, 4
        %s277 = scalar_lea.vmem %s4, %s276
        %s278 = smul.u32 8, %s26
        %s279 = smul.u32 8, %s26
        %p280 = scmp.lt.s32.totalorder %s25, 1
        %s281 = scalar_select %p280, %s25, 1
        %p282 = scmp.lt.s32.totalorder %s279, 7
        %s283 = scalar_select %p282, %s279, 7
        %s284 = smul.addr %s281, 32
        %s285 = sadd.s32 %s283, %s284
        %s286 = smul.addr %s285, 4
        %s287 = scalar_lea.vmem %s3, %s286
        %s288 = smul.u32 8, %s26
        %s289 = smul.u32 8, %s26
        %p290 = scmp.lt.s32.totalorder %s25, 1
        %s291 = scalar_select %p290, %s25, 1
        %p292 = scmp.lt.s32.totalorder %s289, 7
        %s293 = scalar_select %p292, %s289, 7
        %s294 = smul.addr %s291, 32
        %s295 = sadd.s32 %s293, %s294
        %s296 = smul.addr %s295, 4
        %s297 = scalar_lea.vmem %s4, %s296
        %s298 = smul.u32 8, %s26
        %v300 = vld [vmem:[%s231] sm:$0xff]
        %v301 = vld [vmem:[%s231 + $0x8] sm:$0xff]
        %v302 = vld [vmem:[%s231 + $0x10] sm:$0xff]
        %v303 = vld [vmem:[%s231 + $0x18] sm:$0xff]
        %v304 = vld [vmem:[%s231 + $0x20] sm:$0xff]
        %v305 = vld [vmem:[%s231 + $0x28] sm:$0xff]
        %v306 = vld [vmem:[%s231 + $0x30] sm:$0xff]
        %v307 = vld [vmem:[%s231 + $0x38] sm:$0xff]
        %s308 = sld [smem:[#allocation7]]
        %s309 = sld [smem:[#allocation7 + $0x1]]
        %310 = vadd.xlane.f32.xlu0 %v300
        %v311 = vpop.xlane.xlu0 %310
        %312 = vadd.xlane.f32.xlu0 %v301
        %v313 = vpop.xlane.xlu0 %312
        %314 = vadd.xlane.f32.xlu0 %v302
        %v315 = vpop.xlane.xlu0 %314
        %316 = vadd.xlane.f32.xlu0 %v303
        %v317 = vpop.xlane.xlu0 %316
        %318 = vadd.xlane.f32.xlu0 %v304
        %v319 = vpop.xlane.xlu0 %318
        %320 = vadd.xlane.f32.xlu0 %v305
        %v321 = vpop.xlane.xlu0 %320
        %322 = vadd.xlane.f32.xlu0 %v306
        %v323 = vpop.xlane.xlu0 %322
        %324 = vadd.xlane.f32.xlu0 %v307
        %v325 = vpop.xlane.xlu0 %324
        %v326 = vrcp.pop 128.0
        %v327 = vmul.f32 %v311, %v326
        %v328 = vmul.f32 %v313, %v326
        %v329 = vmul.f32 %v315, %v326
        %v330 = vmul.f32 %v317, %v326
        %v331 = vmul.f32 %v319, %v326
        %v332 = vmul.f32 %v321, %v326
        %v333 = vmul.f32 %v323, %v326
        %v334 = vmul.f32 %v325, %v326
        %v335 = vsub.f32 %v300, %v327
        %v336 = vsub.f32 %v301, %v328
        %v337 = vsub.f32 %v302, %v329
        %v338 = vsub.f32 %v303, %v330
        %v339 = vsub.f32 %v304, %v331
        %v340 = vsub.f32 %v305, %v332
        %v341 = vsub.f32 %v306, %v333
        %v342 = vsub.f32 %v307, %v334
        %v343 = vmul.f32 %v335, %v335
        %v344 = vmul.f32 %v336, %v336
        %v345 = vmul.f32 %v337, %v337
        %v346 = vmul.f32 %v338, %v338
        %v347 = vmul.f32 %v339, %v339
        %v348 = vmul.f32 %v340, %v340
        %v349 = vmul.f32 %v341, %v341
        %v350 = vmul.f32 %v342, %v342
        %351 = vadd.xlane.f32.xlu0 %v343
        %v352 = vpop.xlane.xlu0 %351
        %353 = vadd.xlane.f32.xlu0 %v344
        %v354 = vpop.xlane.xlu0 %353
        %355 = vadd.xlane.f32.xlu0 %v345
        %v356 = vpop.xlane.xlu0 %355
        %357 = vadd.xlane.f32.xlu0 %v346
        %v358 = vpop.xlane.xlu0 %357
        %359 = vadd.xlane.f32.xlu0 %v347
        %v360 = vpop.xlane.xlu0 %359
        %361 = vadd.xlane.f32.xlu0 %v348
        %v362 = vpop.xlane.xlu0 %361
        %363 = vadd.xlane.f32.xlu0 %v349
        %v364 = vpop.xlane.xlu0 %363
        %365 = vadd.xlane.f32.xlu0 %v350
        %v366 = vpop.xlane.xlu0 %365
        %v367 = vmul.f32 %v352, 0.007874016
        %v368 = vmul.f32 %v354, 0.007874016
        %v369 = vmul.f32 %v356, 0.007874016
        %v370 = vmul.f32 %v358, 0.007874016
        %v371 = vmul.f32 %v360, 0.007874016
        %v372 = vmul.f32 %v362, 0.007874016
        %v373 = vmul.f32 %v364, 0.007874016
        %v374 = vmul.f32 %v366, 0.007874016
        %v375 = vrsqrt.pop %v367
        %v376 = vmul.f32 %v367, %v375
        %vm377 = vcmp.eq.f32.partialorder %v367, inf
        %v378 = vsel %vm377, %v367, %v376
        %vm379 = vcmp.eq.f32.partialorder %v367, 0.0
        %v380 = vand.u32 %v367, 2147483648
        %v381 = vsel %vm379, %v380, %v378
        %v382 = vrsqrt.pop %v368
        %v383 = vmul.f32 %v368, %v382
        %vm384 = vcmp.eq.f32.partialorder %v368, inf
        %v385 = vsel %vm384, %v368, %v383
        %vm386 = vcmp.eq.f32.partialorder %v368, 0.0
        %v387 = vand.u32 %v368, 2147483648
        %v388 = vsel %vm386, %v387, %v385
        %v389 = vrsqrt.pop %v369
        %v390 = vmul.f32 %v369, %v389
        %vm391 = vcmp.eq.f32.partialorder %v369, inf
        %v392 = vsel %vm391, %v369, %v390
        %vm393 = vcmp.eq.f32.partialorder %v369, 0.0
        %v394 = vand.u32 %v369, 2147483648
        %v395 = vsel %vm393, %v394, %v392
        %v396 = vrsqrt.pop %v370
        %v397 = vmul.f32 %v370, %v396
        %vm398 = vcmp.eq.f32.partialorder %v370, inf
        %v399 = vsel %vm398, %v370, %v397
        %vm400 = vcmp.eq.f32.partialorder %v370, 0.0
        %v401 = vand.u32 %v370, 2147483648
        %v402 = vsel %vm400, %v401, %v399
        %v403 = vrsqrt.pop %v371
        %v404 = vmul.f32 %v371, %v403
        %vm405 = vcmp.eq.f32.partialorder %v371, inf
        %v406 = vsel %vm405, %v371, %v404
        %vm407 = vcmp.eq.f32.partialorder %v371, 0.0
        %v408 = vand.u32 %v371, 2147483648
        %v409 = vsel %vm407, %v408, %v406
        %v410 = vrsqrt.pop %v372
        %v411 = vmul.f32 %v372, %v410
        %vm412 = vcmp.eq.f32.partialorder %v372, inf
        %v413 = vsel %vm412, %v372, %v411
        %vm414 = vcmp.eq.f32.partialorder %v372, 0.0
        %v415 = vand.u32 %v372, 2147483648
        %v416 = vsel %vm414, %v415, %v413
        %v417 = vrsqrt.pop %v373
        %v418 = vmul.f32 %v373, %v417
        %vm419 = vcmp.eq.f32.partialorder %v373, inf
        %v420 = vsel %vm419, %v373, %v418
        %vm421 = vcmp.eq.f32.partialorder %v373, 0.0
        %v422 = vand.u32 %v373, 2147483648
        %v423 = vsel %vm421, %v422, %v420
        %v424 = vrsqrt.pop %v374
        %v425 = vmul.f32 %v374, %v424
        %vm426 = vcmp.eq.f32.partialorder %v374, inf
        %v427 = vsel %vm426, %v374, %v425
        %vm428 = vcmp.eq.f32.partialorder %v374, 0.0
        %v429 = vand.u32 %v374, 2147483648
        %v430 = vsel %vm428, %v429, %v427
        %v431 = vadd.f32 %v381, 1e-06
        %v432 = vadd.f32 %v388, 1e-06
        %v433 = vadd.f32 %v395, 1e-06
        %v434 = vadd.f32 %v402, 1e-06
        %v435 = vadd.f32 %v409, 1e-06
        %v436 = vadd.f32 %v416, 1e-06
        %v437 = vadd.f32 %v423, 1e-06
        %v438 = vadd.f32 %v430, 1e-06
        %v439 = vrcp.pop %v431
        %v440 = vrcp.pop %v432
        %v441 = vrcp.pop %v433
        %v442 = vrcp.pop %v434
        %v443 = vrcp.pop %v435
        %v444 = vrcp.pop %v436
        %v445 = vrcp.pop %v437
        %v446 = vrcp.pop %v438
        %v447 = vstv %s308
        %v448 = vmul.f32 %v447, %v335
        %v449 = vmul.f32 %v447, %v336
        %v450 = vmul.f32 %v447, %v337
        %v451 = vmul.f32 %v447, %v338
        %v452 = vmul.f32 %v447, %v339
        %v453 = vmul.f32 %v447, %v340
        %v454 = vmul.f32 %v447, %v341
        %v455 = vmul.f32 %v447, %v342
        %v456 = vmul.f32 %v448, %v439
        %v457 = vmul.f32 %v449, %v440
        %v458 = vmul.f32 %v450, %v441
        %v459 = vmul.f32 %v451, %v442
        %v460 = vmul.f32 %v452, %v443
        %v461 = vmul.f32 %v453, %v444
        %v462 = vmul.f32 %v454, %v445
        %v463 = vmul.f32 %v455, %v446
        %v464 = vstv %s309
        %v465 = vadd.f32 %v456, %v464
        %v466 = vadd.f32 %v457, %v464
        %v467 = vadd.f32 %v458, %v464
        %v468 = vadd.f32 %v459, %v464
        %v469 = vadd.f32 %v460, %v464
        %v470 = vadd.f32 %v461, %v464
        %v471 = vadd.f32 %v462, %v464
        %v472 = vadd.f32 %v463, %v464
        %v473 = vpack.c.bf16 %v466, %v465
        %v474 = vpack.c.bf16 %v468, %v467
        %v475 = vpack.c.bf16 %v470, %v469
        %v476 = vpack.c.bf16 %v472, %v471
        %v477 = vld [vmem:[#allocation5] sm:$0xff]
        %v478 = vld [vmem:[#allocation5 + $0x8] sm:$0xff]
        %v479 = vld [vmem:[#allocation5 + $0x10] sm:$0xff]
        %v480 = vld [vmem:[#allocation5 + $0x18] sm:$0xff]
        %v481 = vld [vmem:[#allocation5 + $0x20] sm:$0xff]
        %v482 = vld [vmem:[#allocation5 + $0x28] sm:$0xff]
        %v483 = vld [vmem:[#allocation5 + $0x30] sm:$0xff]
        %v484 = vld [vmem:[#allocation5 + $0x38] sm:$0xff]
        %v485 = vld [vmem:[#allocation5 + $0x40] sm:$0xff]
        %v486 = vld [vmem:[#allocation5 + $0x48] sm:$0xff]
        %v487 = vld [vmem:[#allocation5 + $0x50] sm:$0xff]
        %v488 = vld [vmem:[#allocation5 + $0x58] sm:$0xff]
        %v489 = vld [vmem:[#allocation5 + $0x60] sm:$0xff]
        %v490 = vld [vmem:[#allocation5 + $0x68] sm:$0xff]
        %v491 = vld [vmem:[#allocation5 + $0x70] sm:$0xff]
        %v492 = vld [vmem:[#allocation5 + $0x78] sm:$0xff]
        %v509 = vunpack.c.l.b16 %v477
        %v510 = vunpack.c.h.b16 %v477
        %v511 = vunpack.c.l.b16 %v478
        %v512 = vunpack.c.h.b16 %v478
        %v513 = vunpack.c.l.b16 %v479
        %v514 = vunpack.c.h.b16 %v479
        %v515 = vunpack.c.l.b16 %v480
        %v516 = vunpack.c.h.b16 %v480
        %v517 = vunpack.c.l.b16 %v481
        %v518 = vunpack.c.h.b16 %v481
        %v519 = vunpack.c.l.b16 %v482
        %v520 = vunpack.c.h.b16 %v482
        %v521 = vunpack.c.l.b16 %v483
        %v522 = vunpack.c.h.b16 %v483
        %v523 = vunpack.c.l.b16 %v484
        %v524 = vunpack.c.h.b16 %v484
        %v525 = vunpack.c.l.b16 %v485
        %v526 = vunpack.c.h.b16 %v485
        %v527 = vunpack.c.l.b16 %v486
        %v528 = vunpack.c.h.b16 %v486
        %v529 = vunpack.c.l.b16 %v487
        %v530 = vunpack.c.h.b16 %v487
        %v531 = vunpack.c.l.b16 %v488
        %v532 = vunpack.c.h.b16 %v488
        %v533 = vunpack.c.l.b16 %v489
        %v534 = vunpack.c.h.b16 %v489
        %v535 = vunpack.c.l.b16 %v490
        %v536 = vunpack.c.h.b16 %v490
        %v537 = vunpack.c.l.b16 %v491
        %v538 = vunpack.c.h.b16 %v491
        %v539 = vunpack.c.l.b16 %v492
        %v540 = vunpack.c.h.b16 %v492
        %v541 = vpack.c.b16 %v511, %v509
        %v542 = vpack.c.b16 %v512, %v510
        %v543 = vpack.c.b16 %v515, %v513
        %v544 = vpack.c.b16 %v516, %v514
        %v545 = vpack.c.b16 %v519, %v517
        %v546 = vpack.c.b16 %v520, %v518
        %v547 = vpack.c.b16 %v523, %v521
        %v548 = vpack.c.b16 %v524, %v522
        %v549 = vpack.c.b16 %v527, %v525
        %v550 = vpack.c.b16 %v528, %v526
        %v551 = vpack.c.b16 %v531, %v529
        %v552 = vpack.c.b16 %v532, %v530
        %v553 = vpack.c.b16 %v535, %v533
        %v554 = vpack.c.b16 %v536, %v534
        %v555 = vpack.c.b16 %v539, %v537
        %v556 = vpack.c.b16 %v540, %v538
        %573 = vmatprep.subr.bf16.mxu0 %v556
        %574 = vmatpush1.bf16.msra.mxu0 %v555
        %575 = vmatprep.subr.bf16.mxu0 %v554
        %576 = vmatpush1.bf16.msra.mxu0 %v553
        %577 = vmatprep.subr.bf16.mxu0 %v552
        %578 = vmatpush1.bf16.msra.mxu0 %v551
        %579 = vmatprep.subr.bf16.mxu0 %v550
        %580 = vmatpush1.bf16.msra.mxu0 %v549
        %581 = vmatprep.subr.bf16.mxu0 %v548
        %582 = vmatpush1.bf16.msra.mxu0 %v547
        %583 = vmatprep.subr.bf16.mxu0 %v546
        %584 = vmatpush1.bf16.msra.mxu0 %v545
        %585 = vmatprep.subr.bf16.mxu0 %v544
        %586 = vmatpush1.bf16.msra.mxu0 %v543
        %587 = vmatprep.subr.bf16.mxu0 %v542
        %588 = vmatpush1.bf16.msra.mxu0 %v541
        %589 = vmatprep.subr.bf16.mxu0 0
        %590 = vmatpush2.bf16.msra.mxu0 0
        %591 = vmatprep.subr.bf16.mxu0 0
        %592 = vmatpush2.bf16.msra.mxu0 0
        %593 = vmatprep.subr.bf16.mxu0 0
        %594 = vmatpush2.bf16.msra.mxu0 0
        %595 = vmatprep.subr.bf16.mxu0 0
        %596 = vmatpush2.bf16.msra.mxu0 0
        %597 = vmatprep.subr.bf16.mxu0 0
        %598 = vmatpush2.bf16.msra.mxu0 0
        %599 = vmatprep.subr.bf16.mxu0 0
        %600 = vmatpush2.bf16.msra.mxu0 0
        %601 = vmatprep.subr.bf16.mxu0 0
        %602 = vmatpush2.bf16.msra.mxu0 0
        %603 = vmatprep.subr.bf16.mxu0 0
        %604 = vmatpush2.bf16.msra.mxu0 0
        %605 = vmatprep.mubr.bf16.mxu0 0
        %606 = vmatmul.mubr.bf16.gmra.mxu0 %v473
        %v607 = vpop.f32.mrf.mxu0
        %v608 = vadd.f32 0.0, %v607
        %v609 = vpop.f32.mrf.mxu0
        %v610 = vadd.f32 0.0, %v609
        %v611 = vpop.f32.mrf.mxu0
        %v612 = vadd.f32 0.0, %v611
        %v613 = vpop.f32.mrf.mxu0
        %v614 = vadd.f32 0.0, %v613
        %615 = vmatprep.mubr.bf16.mxu0 0
        %616 = vmatmul.mubr.bf16.gmra.mxu0 %v474
        %v617 = vpop.f32.mrf.mxu0
        %v618 = vadd.f32 0.0, %v617
        %v619 = vpop.f32.mrf.mxu0
        %v620 = vadd.f32 0.0, %v619
        %v621 = vpop.f32.mrf.mxu0
        %v622 = vadd.f32 0.0, %v621
        %v623 = vpop.f32.mrf.mxu0
        %v624 = vadd.f32 0.0, %v623
        %625 = vmatprep.mubr.bf16.mxu0 0
        %626 = vmatmul.mubr.bf16.gmra.mxu0 %v475
        %v627 = vpop.f32.mrf.mxu0
        %v628 = vadd.f32 0.0, %v627
        %v629 = vpop.f32.mrf.mxu0
        %v630 = vadd.f32 0.0, %v629
        %v631 = vpop.f32.mrf.mxu0
        %v632 = vadd.f32 0.0, %v631
        %v633 = vpop.f32.mrf.mxu0
        %v634 = vadd.f32 0.0, %v633
        %635 = vmatprep.mubr.bf16.mxu0 0
        %636 = vmatmul.mubr.bf16.gmra.mxu0 %v476
        %v637 = vpop.f32.mrf.mxu0
        %v638 = vadd.f32 0.0, %v637
        %v639 = vpop.f32.mrf.mxu0
        %v640 = vadd.f32 0.0, %v639
        %v641 = vpop.f32.mrf.mxu0
        %v642 = vadd.f32 0.0, %v641
        %v643 = vpop.f32.mrf.mxu0
        %v644 = vadd.f32 0.0, %v643
        %645 = vdwg.mxu0
        %v646 = vpack.c.bf16 %v612, %v608
        %v647 = vpack.c.bf16 %v614, %v610
        %v648 = vpack.c.bf16 %v622, %v618
        %v649 = vpack.c.bf16 %v624, %v620
        %v650 = vpack.c.bf16 %v632, %v628
        %v651 = vpack.c.bf16 %v634, %v630
        %v652 = vpack.c.bf16 %v642, %v638
        %v653 = vpack.c.bf16 %v644, %v640
        %v658 = vunpack.c.l.b16 %v646
        %v659 = vunpack.c.h.b16 %v646
        %v660 = vunpack.c.l.b16 %v648
        %v661 = vunpack.c.h.b16 %v648
        %v662 = vunpack.c.l.b16 %v650
        %v663 = vunpack.c.h.b16 %v650
        %v664 = vunpack.c.l.b16 %v652
        %v665 = vunpack.c.h.b16 %v652
        %v666 = vpack.c.b16 %v658, %v658
        %v667 = vpack.c.b16 %v659, %v659
        %v668 = vpack.c.b16 %v660, %v660
        %v669 = vpack.c.b16 %v661, %v661
        %v670 = vpack.c.b16 %v662, %v662
        %v671 = vpack.c.b16 %v663, %v663
        %v672 = vpack.c.b16 %v664, %v664
        %v673 = vpack.c.b16 %v665, %v665
        %vm682 = vcmask 257024
        %683 = vst.msk [vmem:[%s287] sm:$0xf] %vm682, %v666
        %684 = vst.msk [vmem:[%s287 + $0x4] sm:$0xf] %vm682, %v667
        %685 = vst.msk [vmem:[%s287 + $0x8] sm:$0xf] %vm682, %v668
        %686 = vst.msk [vmem:[%s287 + $0xc] sm:$0xf] %vm682, %v669
        %687 = vst.msk [vmem:[%s287 + $0x10] sm:$0xf] %vm682, %v670
        %688 = vst.msk [vmem:[%s287 + $0x14] sm:$0xf] %vm682, %v671
        %689 = vst.msk [vmem:[%s287 + $0x18] sm:$0xf] %vm682, %v672
        %690 = vst.msk [vmem:[%s287 + $0x1c] sm:$0xf] %vm682, %v673
        %v695 = vunpack.c.l.b16 %v647
        %v696 = vunpack.c.h.b16 %v647
        %v697 = vunpack.c.l.b16 %v649
        %v698 = vunpack.c.h.b16 %v649
        %v699 = vunpack.c.l.b16 %v651
        %v700 = vunpack.c.h.b16 %v651
        %v701 = vunpack.c.l.b16 %v653
        %v702 = vunpack.c.h.b16 %v653
        %v703 = vpack.c.b16 %v695, %v695
        %v704 = vpack.c.b16 %v696, %v696
        %v705 = vpack.c.b16 %v697, %v697
        %v706 = vpack.c.b16 %v698, %v698
        %v707 = vpack.c.b16 %v699, %v699
        %v708 = vpack.c.b16 %v700, %v700
        %v709 = vpack.c.b16 %v701, %v701
        %v710 = vpack.c.b16 %v702, %v702
        %719 = vst.msk [vmem:[%s297] sm:$0xf] %vm682, %v703
        %720 = vst.msk [vmem:[%s297 + $0x4] sm:$0xf] %vm682, %v704
        %721 = vst.msk [vmem:[%s297 + $0x8] sm:$0xf] %vm682, %v705
        %722 = vst.msk [vmem:[%s297 + $0xc] sm:$0xf] %vm682, %v706
        %723 = vst.msk [vmem:[%s297 + $0x10] sm:$0xf] %vm682, %v707
        %724 = vst.msk [vmem:[%s297 + $0x14] sm:$0xf] %vm682, %v708
        %725 = vst.msk [vmem:[%s297 + $0x18] sm:$0xf] %vm682, %v709
        %726 = vst.msk [vmem:[%s297 + $0x1c] sm:$0xf] %vm682, %v710
        %727 = vrot.lane.b32.xlu0 %v666, 96
        %v728 = vpop.permute.xlu0 %727
        %729 = vrot.lane.b32.xlu0 %v667, 96
        %v730 = vpop.permute.xlu0 %729
        %731 = vrot.lane.b32.xlu0 %v668, 96
        %v732 = vpop.permute.xlu0 %731
        %733 = vrot.lane.b32.xlu0 %v669, 96
        %v734 = vpop.permute.xlu0 %733
        %735 = vrot.lane.b32.xlu0 %v670, 96
        %v736 = vpop.permute.xlu0 %735
        %737 = vrot.lane.b32.xlu0 %v671, 96
        %v738 = vpop.permute.xlu0 %737
        %739 = vrot.lane.b32.xlu0 %v672, 96
        %v740 = vpop.permute.xlu0 %739
        %741 = vrot.lane.b32.xlu0 %v673, 96
        %v742 = vpop.permute.xlu0 %741
        %s751 = scalar_lea.vmem %s287, 32
        %752 = vst.msk [vmem:[%s751] sm:$0xf] %vm682, %v728
        %753 = vst.msk [vmem:[%s751 + $0x4] sm:$0xf] %vm682, %v730
        %754 = vst.msk [vmem:[%s751 + $0x8] sm:$0xf] %vm682, %v732
        %755 = vst.msk [vmem:[%s751 + $0xc] sm:$0xf] %vm682, %v734
        %756 = vst.msk [vmem:[%s751 + $0x10] sm:$0xf] %vm682, %v736
        %757 = vst.msk [vmem:[%s751 + $0x14] sm:$0xf] %vm682, %v738
        %758 = vst.msk [vmem:[%s751 + $0x18] sm:$0xf] %vm682, %v740
        %759 = vst.msk [vmem:[%s751 + $0x1c] sm:$0xf] %vm682, %v742
        %760 = vrot.lane.b32.xlu0 %v703, 96
        %v761 = vpop.permute.xlu0 %760
        %762 = vrot.lane.b32.xlu0 %v704, 96
        %v763 = vpop.permute.xlu0 %762
        %764 = vrot.lane.b32.xlu0 %v705, 96
        %v765 = vpop.permute.xlu0 %764
        %766 = vrot.lane.b32.xlu0 %v706, 96
        %v767 = vpop.permute.xlu0 %766
        %768 = vrot.lane.b32.xlu0 %v707, 96
        %v769 = vpop.permute.xlu0 %768
        %770 = vrot.lane.b32.xlu0 %v708, 96
        %v771 = vpop.permute.xlu0 %770
        %772 = vrot.lane.b32.xlu0 %v709, 96
        %v773 = vpop.permute.xlu0 %772
        %774 = vrot.lane.b32.xlu0 %v710, 96
        %v775 = vpop.permute.xlu0 %774
        %s784 = scalar_lea.vmem %s297, 32
        %785 = vst.msk [vmem:[%s784] sm:$0xf] %vm682, %v761
        %786 = vst.msk [vmem:[%s784 + $0x4] sm:$0xf] %vm682, %v763
        %787 = vst.msk [vmem:[%s784 + $0x8] sm:$0xf] %vm682, %v765
        %788 = vst.msk [vmem:[%s784 + $0xc] sm:$0xf] %vm682, %v767
        %789 = vst.msk [vmem:[%s784 + $0x10] sm:$0xf] %vm682, %v769
        %790 = vst.msk [vmem:[%s784 + $0x14] sm:$0xf] %vm682, %v771
        %791 = vst.msk [vmem:[%s784 + $0x18] sm:$0xf] %vm682, %v773
        %792 = vst.msk [vmem:[%s784 + $0x1c] sm:$0xf] %vm682, %v775
        %793 = vrot.lane.b32.xlu0 %v666, 64
        %v794 = vpop.permute.xlu0 %793
        %795 = vrot.lane.b32.xlu0 %v667, 64
        %v796 = vpop.permute.xlu0 %795
        %797 = vrot.lane.b32.xlu0 %v668, 64
        %v798 = vpop.permute.xlu0 %797
        %799 = vrot.lane.b32.xlu0 %v669, 64
        %v800 = vpop.permute.xlu0 %799
        %801 = vrot.lane.b32.xlu0 %v670, 64
        %v802 = vpop.permute.xlu0 %801
        %803 = vrot.lane.b32.xlu0 %v671, 64
        %v804 = vpop.permute.xlu0 %803
        %805 = vrot.lane.b32.xlu0 %v672, 64
        %v806 = vpop.permute.xlu0 %805
        %807 = vrot.lane.b32.xlu0 %v673, 64
        %v808 = vpop.permute.xlu0 %807
        %s817 = scalar_lea.vmem %s287, 64
        %818 = vst.msk [vmem:[%s817] sm:$0xf] %vm682, %v794
        %819 = vst.msk [vmem:[%s817 + $0x4] sm:$0xf] %vm682, %v796
        %820 = vst.msk [vmem:[%s817 + $0x8] sm:$0xf] %vm682, %v798
        %821 = vst.msk [vmem:[%s817 + $0xc] sm:$0xf] %vm682, %v800
        %822 = vst.msk [vmem:[%s817 + $0x10] sm:$0xf] %vm682, %v802
        %823 = vst.msk [vmem:[%s817 + $0x14] sm:$0xf] %vm682, %v804
        %824 = vst.msk [vmem:[%s817 + $0x18] sm:$0xf] %vm682, %v806
        %825 = vst.msk [vmem:[%s817 + $0x1c] sm:$0xf] %vm682, %v808
        %826 = vrot.lane.b32.xlu0 %v703, 64
        %v827 = vpop.permute.xlu0 %826
        %828 = vrot.lane.b32.xlu0 %v704, 64
        %v829 = vpop.permute.xlu0 %828
        %830 = vrot.lane.b32.xlu0 %v705, 64
        %v831 = vpop.permute.xlu0 %830
        %832 = vrot.lane.b32.xlu0 %v706, 64
        %v833 = vpop.permute.xlu0 %832
        %834 = vrot.lane.b32.xlu0 %v707, 64
        %v835 = vpop.permute.xlu0 %834
        %836 = vrot.lane.b32.xlu0 %v708, 64
        %v837 = vpop.permute.xlu0 %836
        %838 = vrot.lane.b32.xlu0 %v709, 64
        %v839 = vpop.permute.xlu0 %838
        %840 = vrot.lane.b32.xlu0 %v710, 64
        %v841 = vpop.permute.xlu0 %840
        %s850 = scalar_lea.vmem %s297, 64
        %851 = vst.msk [vmem:[%s850] sm:$0xf] %vm682, %v827
        %852 = vst.msk [vmem:[%s850 + $0x4] sm:$0xf] %vm682, %v829
        %853 = vst.msk [vmem:[%s850 + $0x8] sm:$0xf] %vm682, %v831
        %854 = vst.msk [vmem:[%s850 + $0xc] sm:$0xf] %vm682, %v833
        %855 = vst.msk [vmem:[%s850 + $0x10] sm:$0xf] %vm682, %v835
        %856 = vst.msk [vmem:[%s850 + $0x14] sm:$0xf] %vm682, %v837
        %857 = vst.msk [vmem:[%s850 + $0x18] sm:$0xf] %vm682, %v839
        %858 = vst.msk [vmem:[%s850 + $0x1c] sm:$0xf] %vm682, %v841
        %859 = vrot.lane.b32.xlu0 %v666, 32
        %v860 = vpop.permute.xlu0 %859
        %861 = vrot.lane.b32.xlu0 %v667, 32
        %v862 = vpop.permute.xlu0 %861
        %863 = vrot.lane.b32.xlu0 %v668, 32
        %v864 = vpop.permute.xlu0 %863
        %865 = vrot.lane.b32.xlu0 %v669, 32
        %v866 = vpop.permute.xlu0 %865
        %867 = vrot.lane.b32.xlu0 %v670, 32
        %v868 = vpop.permute.xlu0 %867
        %869 = vrot.lane.b32.xlu0 %v671, 32
        %v870 = vpop.permute.xlu0 %869
        %871 = vrot.lane.b32.xlu0 %v672, 32
        %v872 = vpop.permute.xlu0 %871
        %873 = vrot.lane.b32.xlu0 %v673, 32
        %v874 = vpop.permute.xlu0 %873
        %s883 = scalar_lea.vmem %s287, 96
        %884 = vst.msk [vmem:[%s883] sm:$0xf] %vm682, %v860
        %885 = vst.msk [vmem:[%s883 + $0x4] sm:$0xf] %vm682, %v862
        %886 = vst.msk [vmem:[%s883 + $0x8] sm:$0xf] %vm682, %v864
        %887 = vst.msk [vmem:[%s883 + $0xc] sm:$0xf] %vm682, %v866
        %888 = vst.msk [vmem:[%s883 + $0x10] sm:$0xf] %vm682, %v868
        %889 = vst.msk [vmem:[%s883 + $0x14] sm:$0xf] %vm682, %v870
        %890 = vst.msk [vmem:[%s883 + $0x18] sm:$0xf] %vm682, %v872
        %891 = vst.msk [vmem:[%s883 + $0x1c] sm:$0xf] %vm682, %v874
        %892 = vrot.lane.b32.xlu0 %v703, 32
        %v893 = vpop.permute.xlu0 %892
        %894 = vrot.lane.b32.xlu0 %v704, 32
        %v895 = vpop.permute.xlu0 %894
        %896 = vrot.lane.b32.xlu0 %v705, 32
        %v897 = vpop.permute.xlu0 %896
        %898 = vrot.lane.b32.xlu0 %v706, 32
        %v899 = vpop.permute.xlu0 %898
        %900 = vrot.lane.b32.xlu0 %v707, 32
        %v901 = vpop.permute.xlu0 %900
        %902 = vrot.lane.b32.xlu0 %v708, 32
        %v903 = vpop.permute.xlu0 %902
        %904 = vrot.lane.b32.xlu0 %v709, 32
        %v905 = vpop.permute.xlu0 %904
        %906 = vrot.lane.b32.xlu0 %v710, 32
        %v907 = vpop.permute.xlu0 %906
        %s916 = scalar_lea.vmem %s297, 96
        %917 = vst.msk [vmem:[%s916] sm:$0xf] %vm682, %v893
        %918 = vst.msk [vmem:[%s916 + $0x4] sm:$0xf] %vm682, %v895
        %919 = vst.msk [vmem:[%s916 + $0x8] sm:$0xf] %vm682, %v897
        %920 = vst.msk [vmem:[%s916 + $0xc] sm:$0xf] %vm682, %v899
        %921 = vst.msk [vmem:[%s916 + $0x10] sm:$0xf] %vm682, %v901
        %922 = vst.msk [vmem:[%s916 + $0x14] sm:$0xf] %vm682, %v903
        %923 = vst.msk [vmem:[%s916 + $0x18] sm:$0xf] %vm682, %v905
        %924 = vst.msk [vmem:[%s916 + $0x1c] sm:$0xf] %vm682, %v907
        %s925 = smul.u32 8, %s26
        %p926 = scmp.lt.s32.totalorder %s25, 1
        %s927 = scalar_select %p926, %s25, 1
        %p928 = scmp.lt.s32.totalorder %s925, 7
        %s929 = scalar_select %p928, %s925, 7
        %s930 = smul.addr %s927, 32
        %s931 = sadd.s32 %s929, %s930
        %s932 = smul.addr %s931, 4
        %s933 = scalar_lea.vmem %s3, %s932
        %s934 = smul.u32 8, %s26
        %p935 = scmp.lt.s32.totalorder %s25, 1
        %s936 = scalar_select %p935, %s25, 1
        %p937 = scmp.lt.s32.totalorder %s934, 7
        %s938 = scalar_select %p937, %s934, 7
        %s939 = smul.addr %s936, 32
        %s940 = sadd.s32 %s938, %s939
        %s941 = smul.addr %s940, 4
        %s942 = scalar_lea.vmem %s4, %s941
        // Predicated region
        $region45: #{tpu_custom_call.1} parent=31 // pred_check
          %p943 = pneg %p123
        $region46: #{tpu_custom_call.1} parent=31 // pred_check_branch
          %945 = sbr.rel (%p943) target = $region48
        $region47: #{tpu_custom_call.1} parent=31 // pred_region
          %s946 = smul.u32 8, %s26
        $region48: #{tpu_custom_call.1} parent=31 // pred_fallthru
          _
        // Predicated region
        $region49: #{tpu_custom_call.1} parent=31 // pred_check
          %p947 = pneg %p151
        $region50: #{tpu_custom_call.1} parent=31 // pred_check_branch
          %949 = sbr.rel (%p947) target = $region52
        $region51: #{tpu_custom_call.1} parent=31 // pred_region
          %s950 = smul.u32 8, %s26
        $region52: #{tpu_custom_call.1} parent=31 // pred_fallthru
          _
      $region32: #{tpu_custom_call.1} parent=5 // pred_fallthru
        _
      %p951 = scmp.le.s32.totalorder 2, %s16
      // Predicated region
      $region53: #{tpu_custom_call.1} parent=5 // pred_check
        %p952 = pneg %p951
      $region54: #{tpu_custom_call.1} parent=5 // pred_check_branch
        %954 = sbr.rel (%p952) target = $region56
      $region55: #{tpu_custom_call.1} parent=5 // pred_region
        %s955 = ssub.s32 %s16, 2
        // Predicated region
        $region57: #{tpu_custom_call.1} parent=55 // pred_check
          %p956 = pneg %p129
        $region58: #{tpu_custom_call.1} parent=55 // pred_check_branch
          %958 = sbr.rel (%p956) target = $region60
        $region59: #{tpu_custom_call.1} parent=55 // pred_region
          %s959 = smul.u32 8, %s28
          %p960 = scmp.lt.s32.totalorder %s27, 1
          %s961 = scalar_select %p960, %s27, 1
          %p962 = scmp.lt.s32.totalorder %s959, 7
          %s963 = scalar_select %p962, %s959, 7
          %s964 = smul.addr %s961, 32
          %s965 = sadd.s32 %s963, %s964
          %s966 = smul.addr %s965, 4
          %s967 = scalar_lea.vmem %s3, %s966
        $region60: #{tpu_custom_call.1} parent=55 // pred_fallthru
          _
        // Predicated region
        $region61: #{tpu_custom_call.1} parent=55 // pred_check
          %p968 = pneg %p157
        $region62: #{tpu_custom_call.1} parent=55 // pred_check_branch
          %970 = sbr.rel (%p968) target = $region64
        $region63: #{tpu_custom_call.1} parent=55 // pred_region
          %s971 = smul.u32 8, %s28
          %p972 = scmp.lt.s32.totalorder %s27, 1
          %s973 = scalar_select %p972, %s27, 1
          %p974 = scmp.lt.s32.totalorder %s971, 7
          %s975 = scalar_select %p974, %s971, 7
          %s976 = smul.addr %s973, 32
          %s977 = sadd.s32 %s975, %s976
          %s978 = smul.addr %s977, 4
          %s979 = scalar_lea.vmem %s4, %s978
        $region64: #{tpu_custom_call.1} parent=55 // pred_fallthru
          _
      $region56: #{tpu_custom_call.1} parent=5 // pred_fallthru
        _
    $region6: #{tpu_custom_call.1} parent=1 // loop_footer
      %s20 = sadd.s32 1, %s16
    $region7: #{tpu_custom_call.1} parent=1 // loop_footer_branch
      %15 = sbr.rel target = $region3
    $region8: #{tpu_custom_call.1} parent=1 // loop_exit
      _
    %980 = vsyncpa [#allocation3], 1
    %s981 = scalar_lea.sflag [#allocation3], 1
    %982 = vsyncpa %s981, 1
    %983 = vsyncpa [#allocation6], 1
    %984 = vsyncpa [#allocation4], 1
    %s985 = scalar_lea.sflag [#allocation4], 1
    %986 = vsyncpa %s985, 1

</llo_original>
